<compile_context>
chip_gen: v7x
topology: tpu7x:2x2x1
jax: 0.10.0
libtpu: 0.0.40
codegen_flags: <defaults>
</compile_context>

<pallas_src>
import jax
import jax.numpy as jnp
from jax.experimental import pallas as pl
from jax.experimental.pallas import tpu as pltpu


# ----------------------------------------------------------------------------
# Kernel: local-attention MLP + sigmoid fuse on one (1, T, C) pixel tile.
# ----------------------------------------------------------------------------
def aff_kernel(tex_ref, shp_ref, xg_ref,
               w1_ref, b1_ref, w2_ref, b2_ref,      # local branch (BN folded), bf16 weights
               out_ref):
    tex = tex_ref[0]                                # [T, C] f32
    shp = shp_ref[0]                                # [T, C] f32
    xi = tex + shp                                  # [T, C] f32

    # ---- local attention: 1x1 conv -> BN -> ReLU -> 1x1 conv -> BN ----
    # bf16 operands, f32 accumulation on the MXU.
    h = jnp.dot(xi.astype(jnp.bfloat16), w1_ref[...],
                preferred_element_type=jnp.float32) + b1_ref[...]          # [T, Ci]
    h = jnp.maximum(h, 0.0)
    xl = jnp.dot(h.astype(jnp.bfloat16), w2_ref[...],
                 preferred_element_type=jnp.float32) + b2_ref[...]         # [T, C]

    # ---- fuse with precomputed global branch (xg broadcasts over rows) ----
    wei = jax.nn.sigmoid(xl + xg_ref[0])            # [T, C]
    out_ref[0] = 2.0 * shp + 2.0 * wei * (tex - shp)


# ----------------------------------------------------------------------------
# Helpers
# ----------------------------------------------------------------------------
def fold_bn(w_io, b_o, gamma, beta, mean, var, eps=1e-5):
    """Fold inference-mode BatchNorm into a 1x1 conv given in [Cin, Cout] form."""
    scale = gamma / jnp.sqrt(var + eps)             # [Cout]
    w_f = w_io * scale[None, :]
    b_f = (b_o - mean) * scale + beta
    return w_f, b_f.reshape(1, -1)


def _pick_hw_tile(hw, target):
    """Largest multiple-of-8 divisor of hw that is <= target (else full hw)."""
    if hw <= target:
        return hw
    t = (target // 8) * 8
    while t >= 8:
        if hw % t == 0:
            return t
        t -= 8
    return hw   # block == full spatial extent is always a legal block shape


# ----------------------------------------------------------------------------
# Forward pass (NHWC end-to-end; no layout transposes on the kernel path).
# hw_tile_target: ~512 rows keeps per-block VMEM small enough for v5e/v6e/v7x
# scoped-VMEM defaults while staying near the HBM roofline.
# ----------------------------------------------------------------------------
def aff_forward(texture_nhwc, shape_nhwc, params, *, hw_tile_target=512):
    N, H, W, C = texture_nhwc.shape
    HW = H * W
    tex = texture_nhwc.reshape(N, HW, C)            # free reshape (contiguous)
    shp = shape_nhwc.reshape(N, HW, C)

    (w1, b1, w2, b2, gw1, gb1, gw2, gb2) = params
    Ci = w1.shape[1]

    # ---- global branch hoisted out of the kernel (full-image mean + tiny MLP) ----
    gx = jnp.mean(tex + shp, axis=1)                # [N, C]
    gh = jnp.maximum(gx @ gw1 + gb1, 0.0)           # [N, Ci]
    xg = (gh @ gw2 + gb2).reshape(N, 1, C)          # [N, 1, C]

    # bf16 matmul operands for the in-kernel local branch.
    w1b = w1.astype(jnp.bfloat16)
    w2b = w2.astype(jnp.bfloat16)

    T = _pick_hw_tile(HW, hw_tile_target)
    n_tiles = HW // T

    pix_spec = pl.BlockSpec((1, T, C), lambda n, t: (n, t, 0))
    xg_spec = pl.BlockSpec((1, 1, C), lambda n, t: (n, 0, 0))
    # Constant index_map -> weights/biases stay VMEM-resident across the grid.
    const = lambda shape: pl.BlockSpec(shape, lambda n, t: (0,) * len(shape))

    out = pl.pallas_call(
        aff_kernel,
        out_shape=jax.ShapeDtypeStruct((N, HW, C), jnp.float32),
        grid_spec=pltpu.PrefetchScalarGridSpec(
            num_scalar_prefetch=0,
            grid=(N, n_tiles),
            in_specs=[
                pix_spec, pix_spec, xg_spec,
                const((C, Ci)), const((1, Ci)), const((Ci, C)), const((1, C)),
            ],
            out_specs=pix_spec,
        ),
        compiler_params=pltpu.CompilerParams(
            dimension_semantics=("parallel", "parallel")),
    )(tex, shp, xg, w1b, b1, w2b, b2)

    return out.reshape(N, H, W, C)


# ----------------------------------------------------------------------------
# Synthetic parameters (BN folded into convs, eval mode) and references
# ----------------------------------------------------------------------------
def make_params(key, C, r):
    Ci = C // r
    ks = jax.random.split(key, 8)

    def conv(k, cin, cout):
        w = jax.random.normal(k, (cin, cout), jnp.float32) * 0.05   # [Cin, Cout]
        b = jnp.linspace(-0.1, 0.1, cout, dtype=jnp.float32)
        return w, b

    def bn(cout, salt):
        gamma = 1.0 + 0.01 * jnp.arange(cout, dtype=jnp.float32)
        beta = 0.02 * jnp.arange(cout, dtype=jnp.float32) - 0.1 * salt
        mean = 0.01 * salt * jnp.ones((cout,), jnp.float32)
        var = 1.0 + 0.05 * salt * jnp.ones((cout,), jnp.float32)
        return gamma, beta, mean, var

    lw1, lb1 = conv(ks[0], C, Ci)
    lw2, lb2 = conv(ks[1], Ci, C)
    w1, b1 = fold_bn(lw1, lb1, *bn(Ci, 1.0))
    w2, b2 = fold_bn(lw2, lb2, *bn(C, 2.0))
    gw1r, gb1r = conv(ks[2], C, Ci)
    gw2r, gb2r = conv(ks[3], Ci, C)
    gw1, gb1 = fold_bn(gw1r, gb1r, *bn(Ci, 3.0))
    gw2, gb2 = fold_bn(gw2r, gb2r, *bn(C, 4.0))
    return (w1, b1, w2, b2, gw1, gb1, gw2, gb2)


def aff_reference_bf16(texture, shape_in, params):
    """Pure-JAX reference mirroring the kernel math (bf16 matmul operands)."""
    (w1, b1, w2, b2, gw1, gb1, gw2, gb2) = params
    N, H, W, C = texture.shape
    tex = texture.reshape(N, H * W, C)
    shp = shape_in.reshape(N, H * W, C)
    xi = tex + shp
    gx = jnp.mean(xi, axis=1)
    gh = jnp.maximum(gx @ gw1 + gb1, 0.0)
    xg = (gh @ gw2 + gb2).reshape(N, 1, C)
    h = jnp.dot(xi.astype(jnp.bfloat16), w1.astype(jnp.bfloat16),
                preferred_element_type=jnp.float32) + b1
    h = jnp.maximum(h, 0.0)
    xl = jnp.dot(h.astype(jnp.bfloat16), w2.astype(jnp.bfloat16),
                 preferred_element_type=jnp.float32) + b2
    wei = jax.nn.sigmoid(xl + xg)
    out = 2.0 * shp + 2.0 * wei * (tex - shp)
    return out.reshape(N, H, W, C)


def aff_reference_f32(texture, shape_in, params):
    """Pure-f32 reference of the folded-BN AFF forward (semantic check)."""
    (w1, b1, w2, b2, gw1, gb1, gw2, gb2) = params
    N, H, W, C = texture.shape
    tex = texture.reshape(N, H * W, C)
    shp = shape_in.reshape(N, H * W, C)
    xi = tex + shp
    xl = jnp.maximum(xi @ w1 + b1, 0.0) @ w2 + b2
    gx = jnp.mean(xi, axis=1, keepdims=True)
    xg = jnp.maximum(gx @ gw1 + gb1, 0.0) @ gw2 + gb2
    wei = jax.nn.sigmoid(xl + xg)
    out = 2.0 * tex * wei + 2.0 * shp * (1.0 - wei)
    return out.reshape(N, H, W, C)


if __name__ == "__main__":
    # Small shapes consistent with the module: channels=128, r=4 -> inter=32.
    N, C, H, W = 2, 128, 16, 16
    r = 4

    key = jax.random.PRNGKey(0)
    k_tex, k_shp, k_par = jax.random.split(key, 3)
    # NHWC end-to-end (no NCHW transposes on the kernel path).
    texture = jax.random.normal(k_tex, (N, H, W, C), jnp.float32)
    shape_in = jax.random.normal(k_shp, (N, H, W, C), jnp.float32)
    params = make_params(k_par, C, r)

    out = aff_forward(texture, shape_in, params)
    out = jax.block_until_ready(out)
    assert out.shape == (N, H, W, C)

    # Tight check vs a reference that mirrors the kernel's bf16 matmul math.
    ref_bf = aff_reference_bf16(texture, shape_in, params)
    assert jnp.allclose(out, ref_bf, atol=1.5e-3, rtol=1.5e-3), "mismatch vs bf16 reference"

    # Loose check vs the pure-f32 module semantics (bf16 matmul rounding only).
    ref_f32 = aff_reference_f32(texture, shape_in, params)
    assert jnp.allclose(out, ref_f32, atol=8e-2, rtol=5e-2), "mismatch vs f32 reference"

    print("KERNEL_OK")
</pallas_src>

<mosaic_0001>
module attributes {stable_mosaic.version = 11 : i64} {
  func.func @aff_kernel(%arg0: i32, %arg1: i32, %arg2: memref<1x256x128xf32, #tpu.memory_space<vmem>>, %arg3: memref<1x256x128xf32, #tpu.memory_space<vmem>>, %arg4: memref<1x1x128xf32, #tpu.memory_space<vmem>>, %arg5: memref<128x32xbf16, #tpu.memory_space<vmem>>, %arg6: memref<1x32xf32, #tpu.memory_space<vmem>>, %arg7: memref<32x128xbf16, #tpu.memory_space<vmem>>, %arg8: memref<1x128xf32, #tpu.memory_space<vmem>>, %arg9: memref<1x256x128xf32, #tpu.memory_space<vmem>>) attributes {dimension_semantics = [#tpu.dimension_semantics<parallel>, #tpu.dimension_semantics<parallel>], iteration_bounds = array<i64: 2, 1>, scalar_prefetch = 0 : i64, scratch_operands = 0 : i64, tpu.core_type = #tpu.core_type<tc>, window_params = [{transform_indices = @transform_0, window_bounds = array<i64: 1, 256, 128>}, {transform_indices = @transform_1, window_bounds = array<i64: 1, 256, 128>}, {transform_indices = @transform_2, window_bounds = array<i64: 1, 1, 128>}, {pipeline_mode = #tpu.pipeline_mode<synchronous>, transform_indices = @transform_3, window_bounds = array<i64: 128, 32>}, {pipeline_mode = #tpu.pipeline_mode<synchronous>, transform_indices = @transform_4, window_bounds = array<i64: 1, 32>}, {pipeline_mode = #tpu.pipeline_mode<synchronous>, transform_indices = @transform_5, window_bounds = array<i64: 32, 128>}, {pipeline_mode = #tpu.pipeline_mode<synchronous>, transform_indices = @transform_6, window_bounds = array<i64: 1, 128>}, {transform_indices = @transform_7, window_bounds = array<i64: 1, 256, 128>}]} {
    %c0 = arith.constant 0 : index
    %c0_0 = arith.constant 0 : index
    %c0_1 = arith.constant 0 : index
    %0 = vector.load %arg2[%c0, %c0_0, %c0_1] : memref<1x256x128xf32, #tpu.memory_space<vmem>>, vector<1x256x128xf32>
    %1 = vector.shape_cast %0 : vector<1x256x128xf32> to vector<256x128xf32>
    %c0_2 = arith.constant 0 : index
    %c0_3 = arith.constant 0 : index
    %c0_4 = arith.constant 0 : index
    %2 = vector.load %arg3[%c0_2, %c0_3, %c0_4] : memref<1x256x128xf32, #tpu.memory_space<vmem>>, vector<1x256x128xf32>
    %3 = vector.shape_cast %2 : vector<1x256x128xf32> to vector<256x128xf32>
    %4 = arith.addf %1, %3 : vector<256x128xf32>
    %5 = arith.truncf %4 : vector<256x128xf32> to vector<256x128xbf16>
    %c0_5 = arith.constant 0 : index
    %c0_6 = arith.constant 0 : index
    %6 = vector.load %arg5[%c0_5, %c0_6] : memref<128x32xbf16, #tpu.memory_space<vmem>>, vector<128x32xbf16>
    %cst = arith.constant dense<0.000000e+00> : vector<256x32xf32>
    %7 = tpu.matmul %5, %6, %cst {dimension_numbers = #tpu.dot_dimension_numbers<[1], [0], [0], [1], [0, 0, 1, 1], [], []>} : vector<256x128xbf16>, vector<128x32xbf16>, vector<256x32xf32> -> vector<256x32xf32>
    %c0_7 = arith.constant 0 : index
    %c0_8 = arith.constant 0 : index
    %8 = vector.load %arg6[%c0_7, %c0_8] : memref<1x32xf32, #tpu.memory_space<vmem>>, vector<1x32xf32>
    %9 = vector.broadcast %8 : vector<1x32xf32> to vector<256x32xf32>
    %10 = arith.addf %7, %9 : vector<256x32xf32>
    %cst_9 = arith.constant 0.000000e+00 : f32
    %11 = vector.broadcast %cst_9 : f32 to vector<256x32xf32>
    %12 = arith.maximumf %10, %11 : vector<256x32xf32>
    %13 = arith.truncf %12 : vector<256x32xf32> to vector<256x32xbf16>
    %c0_10 = arith.constant 0 : index
    %c0_11 = arith.constant 0 : index
    %14 = vector.load %arg7[%c0_10, %c0_11] : memref<32x128xbf16, #tpu.memory_space<vmem>>, vector<32x128xbf16>
    %cst_12 = arith.constant dense<0.000000e+00> : vector<256x128xf32>
    %15 = tpu.matmul %13, %14, %cst_12 {dimension_numbers = #tpu.dot_dimension_numbers<[1], [0], [0], [1], [0, 0, 1, 1], [], []>} : vector<256x32xbf16>, vector<32x128xbf16>, vector<256x128xf32> -> vector<256x128xf32>
    %c0_13 = arith.constant 0 : index
    %c0_14 = arith.constant 0 : index
    %16 = vector.load %arg8[%c0_13, %c0_14] : memref<1x128xf32, #tpu.memory_space<vmem>>, vector<1x128xf32>
    %17 = vector.broadcast %16 : vector<1x128xf32> to vector<256x128xf32>
    %18 = arith.addf %15, %17 : vector<256x128xf32>
    %c0_15 = arith.constant 0 : index
    %c0_16 = arith.constant 0 : index
    %c0_17 = arith.constant 0 : index
    %19 = vector.load %arg4[%c0_15, %c0_16, %c0_17] : memref<1x1x128xf32, #tpu.memory_space<vmem>>, vector<1x1x128xf32>
    %20 = vector.shape_cast %19 : vector<1x1x128xf32> to vector<1x128xf32>
    %21 = vector.broadcast %20 : vector<1x128xf32> to vector<256x128xf32>
    %22 = arith.addf %18, %21 : vector<256x128xf32>
    %23 = arith.negf %22 : vector<256x128xf32>
    %24 = math.exp %23 : vector<256x128xf32>
    %cst_18 = arith.constant 1.000000e+00 : f32
    %25 = vector.broadcast %cst_18 : f32 to vector<256x128xf32>
    %26 = arith.addf %25, %24 : vector<256x128xf32>
    %27 = arith.divf %25, %26 : vector<256x128xf32>
    %cst_19 = arith.constant 2.000000e+00 : f32
    %28 = vector.broadcast %cst_19 : f32 to vector<256x128xf32>
    %29 = arith.mulf %28, %3 : vector<256x128xf32>
    %cst_20 = arith.constant 2.000000e+00 : f32
    %30 = vector.broadcast %cst_20 : f32 to vector<256x128xf32>
    %31 = arith.mulf %30, %27 : vector<256x128xf32>
    %32 = arith.subf %1, %3 : vector<256x128xf32>
    %33 = arith.mulf %31, %32 : vector<256x128xf32>
    %34 = arith.addf %29, %33 : vector<256x128xf32>
    %c0_21 = arith.constant 0 : index
    %c0_22 = arith.constant 0 : index
    %c0_23 = arith.constant 0 : index
    %35 = vector.load %arg9[%c0_21, %c0_22, %c0_23] : memref<1x256x128xf32, #tpu.memory_space<vmem>>, vector<1x256x128xf32>
    %36 = vector.shape_cast %35 : vector<1x256x128xf32> to vector<256x128xf32>
    %37 = vector.shape_cast %34 : vector<256x128xf32> to vector<1x256x128xf32>
    tpu.vector_store %arg9[%c0_21, %c0_22, %c0_23], %37 {strides = array<i32>} : memref<1x256x128xf32, #tpu.memory_space<vmem>>, vector<1x256x128xf32>,
    return
  }
  func.func @transform_0(%arg0: i32, %arg1: i32) -> (i32, i32, i32) {
    %c0_i32 = arith.constant 0 : i32
    %c0_i32_0 = arith.constant 0 : i32
    return %arg0, %arg1, %c0_i32 : i32, i32, i32
  }
  func.func @transform_1(%arg0: i32, %arg1: i32) -> (i32, i32, i32) {
    %c0_i32 = arith.constant 0 : i32
    %c0_i32_0 = arith.constant 0 : i32
    return %arg0, %arg1, %c0_i32 : i32, i32, i32
  }
  func.func @transform_2(%arg0: i32, %arg1: i32) -> (i32, i32, i32) {
    %c0_i32 = arith.constant 0 : i32
    %c0_i32_0 = arith.constant 0 : i32
    %c0_i32_1 = arith.constant 0 : i32
    return %arg0, %c0_i32, %c0_i32_0 : i32, i32, i32
  }
  func.func @transform_3(%arg0: i32, %arg1: i32) -> (i32, i32) {
    %c0_i32 = arith.constant 0 : i32
    %c0_i32_0 = arith.constant 0 : i32
    %c0_i32_1 = arith.constant 0 : i32
    return %c0_i32, %c0_i32_0 : i32, i32
  }
  func.func @transform_4(%arg0: i32, %arg1: i32) -> (i32, i32) {
    %c0_i32 = arith.constant 0 : i32
    %c0_i32_0 = arith.constant 0 : i32
    %c0_i32_1 = arith.constant 0 : i32
    return %c0_i32, %c0_i32_0 : i32, i32
  }
  func.func @transform_5(%arg0: i32, %arg1: i32) -> (i32, i32) {
    %c0_i32 = arith.constant 0 : i32
    %c0_i32_0 = arith.constant 0 : i32
    %c0_i32_1 = arith.constant 0 : i32
    return %c0_i32, %c0_i32_0 : i32, i32
  }
  func.func @transform_6(%arg0: i32, %arg1: i32) -> (i32, i32) {
    %c0_i32 = arith.constant 0 : i32
    %c0_i32_0 = arith.constant 0 : i32
    %c0_i32_1 = arith.constant 0 : i32
    return %c0_i32, %c0_i32_0 : i32, i32
  }
  func.func @transform_7(%arg0: i32, %arg1: i32) -> (i32, i32, i32) {
    %c0_i32 = arith.constant 0 : i32
    %c0_i32_0 = arith.constant 0 : i32
    return %arg0, %arg1, %c0_i32 : i32, i32, i32
  }
}

</mosaic_0001>

<llo_original>
// kernel: tpu_custom_call.1
$region0: #{tpu_custom_call.1}
  #allocation0 [shape = 'u32[]', space=smem, size = 0x4, offset = 0x4, fixed_abs, tag = 'smem constant byte address 0x4 - core index']
  #allocation1 [shape = 'u32[144,128]{1,0:T(1,128)}', space=vmem, size = 0x12000, scoped, tag = 'internal scratch']
  %s0 = inlined_call_operand.hbm [shape: f32[2,256,128], index: 0, kind: input, shape index: {}]
  %s1 = inlined_call_operand.hbm [shape: f32[2,256,128], index: 1, kind: input, shape index: {}]
  %s2 = inlined_call_operand.vmem [shape: f32[2,1,128], index: 2, kind: input, shape index: {}]
  %s3 = inlined_call_operand.vmem [shape: bf16[128,32], index: 3, kind: input, shape index: {}]
  %s4 = inlined_call_operand.vmem [shape: f32[1,32], index: 4, kind: input, shape index: {}]
  %s5 = inlined_call_operand.vmem [shape: bf16[32,128], index: 5, kind: input, shape index: {}]
  %s6 = inlined_call_operand.vmem [shape: f32[1,128], index: 6, kind: input, shape index: {}]
  %s7 = inlined_call_operand.hbm [shape: f32[2,256,128], index: 7, kind: output, shape index: {}]
  %s8 = sld [smem:[#allocation0]]
  $region69: #{tpu_custom_call.1} parent=0
    _
  %s10 = ssub.s32 1, %s8
  %s11 = scalar_select 0, %s10, %s8
  $region1: #{tpu_custom_call.1} parent=0
    #allocation2 [shape = 'u8[262144]{0}', space=vmem, size = 0x40000, scoped, tag = 'input window, operand 0']
    #allocation3 [shape = 's32[2]{0}', space=sflag, size = 0x8, scoped, tag = 'scoped memory for tpu_custom_call.1']
    #allocation4 [shape = 's32[2]{0}', space=sflag, size = 0x8, scoped, tag = 'scoped memory for tpu_custom_call.1']
    #allocation5 [shape = 'u8[262144]{0}', space=vmem, size = 0x40000, scoped, tag = 'input window, operand 1']
    #allocation6 [shape = 's32[2]{0}', space=sflag, size = 0x8, scoped, tag = 'scoped memory for tpu_custom_call.1']
    #allocation7 [shape = 'u8[262144]{0}', space=vmem, size = 0x40000, scoped, tag = 'output window, operand 0']
    %12 = vsyncpa [#allocation3], 0
    %s13 = scalar_lea.sflag [#allocation3], 1
    %14 = vsyncpa %s13, 0
    %15 = vsyncpa [#allocation6], 0
    %s16 = scalar_lea.sflag [#allocation6], 1
    %17 = vsyncpa %s16, 0
    %18 = vsyncpa [#allocation4], 0
    %s19 = scalar_lea.sflag [#allocation4], 1
    %20 = vsyncpa %s19, 0
    loop: start=0, step=1, limit=4
    $region2: #{tpu_custom_call.1} parent=1 // loop_pre_header
      _
    $region3: #{tpu_custom_call.1} parent=1 // loop_header
      %s22 = sphi 0, %s26
      %p23 = scmp.ge.s32.totalorder %s22, 4
      %s29 = sphi 0, %s41
      %s30 = sphi 0, %s37
      %s31 = sphi 0, %s29
      %s32 = sphi 0, %s30
      %s33 = sphi 0, %s31
      %s34 = sphi 0, %s32
      %s46 = sphi 0, %s48
      %s49 = sphi 0, %s46
      %s50 = sphi 0, %s49
      %s66 = sphi 0, %s50
      %s74 = sphi 0, %s76
      %s77 = sphi 0, %s74
      %s78 = sphi 0, %s77
      %s94 = sphi 0, %s78
      %s100 = sphi 0, %s102
      %s103 = sphi 0, %s100
      %s104 = sphi 0, %s103
      %s120 = sphi 0, %s104
      %s124 = sphi 0, %s124
      %s126 = sphi 0, %s124
      %s127 = sphi 0, %s126
      %s141 = sphi 0, %s127
      %s145 = sphi 0, %s145
      %s147 = sphi 0, %s145
      %s148 = sphi 0, %s147
      %s162 = sphi 0, %s148
      %s166 = sphi 0, %s166
      %s168 = sphi 0, %s166
      %s169 = sphi 0, %s168
      %s183 = sphi 0, %s169
      %s187 = sphi 0, %s187
      %s189 = sphi 0, %s187
      %s190 = sphi 0, %s189
      %s204 = sphi 0, %s190
      %s212 = sphi 0, %s214
      %s215 = sphi 0, %s212
      %s216 = sphi 0, %s215
      %s232 = sphi 0, %s216
    $region4: #{tpu_custom_call.1} parent=1 // loop_header_branch
      %25 = sbr.rel (%p23) target = $region8
    $region5: #{tpu_custom_call.1} parent=1 // loop_body
      %s27 = ssub.s32 %s22, 1
      %s28 = ssub.s32 %s22, 2
      %s35 = sadd.s32 1, %s30
      %p36 = scmp.ge.s32.totalorder %s35, 1
      %s37 = scalar_select %p36, 0, %s35
      %s38 = sadd.s32 1, %s29
      %s39 = scalar_select %p36, %s38, %s29
      %p40 = scmp.ge.s32.totalorder %s39, 2
      %s41 = scalar_select %p40, 0, %s39
      %s42 = ssub.s32 %s29, %s41
      %s43 = ssub.s32 %s30, %s37
      %s44 = sor.u32 %s42, %s43
      %p45 = scmp.eq.s32.totalorder %s44, 0
      %s47 = sadd.s32 %s46, 1
      %s48 = scalar_select %p45, %s46, %s47
      %p51 = pneg %p45
      %p52 = scmp.eq.s32.totalorder %s22, 1
      %p53 = por %p51, %p52
      %p54 = scmp.ne.s32.totalorder %s46, %s49
      %p55 = scmp.eq.s32.totalorder %s22, 0
      %p56 = por %p54, %p55
      %p57 = scmp.ne.s32.totalorder %s46, %s49
      %p58 = scmp.eq.s32.totalorder %s27, 1
      %p59 = por %p57, %p58
      %p60 = scmp.ne.s32.totalorder %s49, %s50
      %p61 = scmp.eq.s32.totalorder %s27, 0
      %p62 = por %p60, %p61
      %p63 = scmp.ne.s32.totalorder %s49, %s50
      %p64 = scmp.eq.s32.totalorder %s28, 1
      %p65 = por %p63, %p64
      %p67 = scmp.ne.s32.totalorder %s50, %s66
      %p68 = scmp.eq.s32.totalorder %s28, 0
      %p69 = por %p67, %p68
      %s70 = ssub.s32 %s29, %s41
      %s71 = ssub.s32 %s30, %s37
      %s72 = sor.u32 %s70, %s71
      %p73 = scmp.eq.s32.totalorder %s72, 0
      %s75 = sadd.s32 %s74, 1
      %s76 = scalar_select %p73, %s74, %s75
      %p79 = pneg %p73
      %p80 = scmp.eq.s32.totalorder %s22, 1
      %p81 = por %p79, %p80
      %p82 = scmp.ne.s32.totalorder %s74, %s77
      %p83 = scmp.eq.s32.totalorder %s22, 0
      %p84 = por %p82, %p83
      %p85 = scmp.ne.s32.totalorder %s74, %s77
      %p86 = scmp.eq.s32.totalorder %s27, 1
      %p87 = por %p85, %p86
      %p88 = scmp.ne.s32.totalorder %s77, %s78
      %p89 = scmp.eq.s32.totalorder %s27, 0
      %p90 = por %p88, %p89
      %p91 = scmp.ne.s32.totalorder %s77, %s78
      %p92 = scmp.eq.s32.totalorder %s28, 1
      %p93 = por %p91, %p92
      %p95 = scmp.ne.s32.totalorder %s78, %s94
      %p96 = scmp.eq.s32.totalorder %s28, 0
      %p97 = por %p95, %p96
      %s98 = ssub.s32 %s29, %s41
      %p99 = scmp.eq.s32.totalorder %s98, 0
      %s101 = sadd.s32 %s100, 1
      %s102 = scalar_select %p99, %s100, %s101
      %p105 = pneg %p99
      %p106 = scmp.eq.s32.totalorder %s22, 1
      %p107 = por %p105, %p106
      %p108 = scmp.ne.s32.totalorder %s100, %s103
      %p109 = scmp.eq.s32.totalorder %s22, 0
      %p110 = por %p108, %p109
      %p111 = scmp.ne.s32.totalorder %s100, %s103
      %p112 = scmp.eq.s32.totalorder %s27, 1
      %p113 = por %p111, %p112
      %p114 = scmp.ne.s32.totalorder %s103, %s104
      %p115 = scmp.eq.s32.totalorder %s27, 0
      %p116 = por %p114, %p115
      %p117 = scmp.ne.s32.totalorder %s103, %s104
      %p118 = scmp.eq.s32.totalorder %s28, 1
      %p119 = por %p117, %p118
      %p121 = scmp.ne.s32.totalorder %s104, %s120
      %p122 = scmp.eq.s32.totalorder %s28, 0
      %p123 = por %p121, %p122
      %s125 = sadd.s32 %s124, 1
      %p128 = scmp.eq.s32.totalorder %s22, 1
      %p129 = scmp.ne.s32.totalorder %s124, %s126
      %p130 = scmp.eq.s32.totalorder %s22, 0
      %p131 = por %p129, %p130
      %p132 = scmp.ne.s32.totalorder %s124, %s126
      %p133 = scmp.eq.s32.totalorder %s27, 1
      %p134 = por %p132, %p133
      %p135 = scmp.ne.s32.totalorder %s126, %s127
      %p136 = scmp.eq.s32.totalorder %s27, 0
      %p137 = por %p135, %p136
      %p138 = scmp.ne.s32.totalorder %s126, %s127
      %p139 = scmp.eq.s32.totalorder %s28, 1
      %p140 = por %p138, %p139
      %p142 = scmp.ne.s32.totalorder %s127, %s141
      %p143 = scmp.eq.s32.totalorder %s28, 0
      %p144 = por %p142, %p143
      %s146 = sadd.s32 %s145, 1
      %p149 = scmp.eq.s32.totalorder %s22, 1
      %p150 = scmp.ne.s32.totalorder %s145, %s147
      %p151 = scmp.eq.s32.totalorder %s22, 0
      %p152 = por %p150, %p151
      %p153 = scmp.ne.s32.totalorder %s145, %s147
      %p154 = scmp.eq.s32.totalorder %s27, 1
      %p155 = por %p153, %p154
      %p156 = scmp.ne.s32.totalorder %s147, %s148
      %p157 = scmp.eq.s32.totalorder %s27, 0
      %p158 = por %p156, %p157
      %p159 = scmp.ne.s32.totalorder %s147, %s148
      %p160 = scmp.eq.s32.totalorder %s28, 1
      %p161 = por %p159, %p160
      %p163 = scmp.ne.s32.totalorder %s148, %s162
      %p164 = scmp.eq.s32.totalorder %s28, 0
      %p165 = por %p163, %p164
      %s167 = sadd.s32 %s166, 1
      %p170 = scmp.eq.s32.totalorder %s22, 1
      %p171 = scmp.ne.s32.totalorder %s166, %s168
      %p172 = scmp.eq.s32.totalorder %s22, 0
      %p173 = por %p171, %p172
      %p174 = scmp.ne.s32.totalorder %s166, %s168
      %p175 = scmp.eq.s32.totalorder %s27, 1
      %p176 = por %p174, %p175
      %p177 = scmp.ne.s32.totalorder %s168, %s169
      %p178 = scmp.eq.s32.totalorder %s27, 0
      %p179 = por %p177, %p178
      %p180 = scmp.ne.s32.totalorder %s168, %s169
      %p181 = scmp.eq.s32.totalorder %s28, 1
      %p182 = por %p180, %p181
      %p184 = scmp.ne.s32.totalorder %s169, %s183
      %p185 = scmp.eq.s32.totalorder %s28, 0
      %p186 = por %p184, %p185
      %s188 = sadd.s32 %s187, 1
      %p191 = scmp.eq.s32.totalorder %s22, 1
      %p192 = scmp.ne.s32.totalorder %s187, %s189
      %p193 = scmp.eq.s32.totalorder %s22, 0
      %p194 = por %p192, %p193
      %p195 = scmp.ne.s32.totalorder %s187, %s189
      %p196 = scmp.eq.s32.totalorder %s27, 1
      %p197 = por %p195, %p196
      %p198 = scmp.ne.s32.totalorder %s189, %s190
      %p199 = scmp.eq.s32.totalorder %s27, 0
      %p200 = por %p198, %p199
      %p201 = scmp.ne.s32.totalorder %s189, %s190
      %p202 = scmp.eq.s32.totalorder %s28, 1
      %p203 = por %p201, %p202
      %p205 = scmp.ne.s32.totalorder %s190, %s204
      %p206 = scmp.eq.s32.totalorder %s28, 0
      %p207 = por %p205, %p206
      %s208 = ssub.s32 %s29, %s41
      %s209 = ssub.s32 %s30, %s37
      %s210 = sor.u32 %s208, %s209
      %p211 = scmp.eq.s32.totalorder %s210, 0
      %s213 = sadd.s32 %s212, 1
      %s214 = scalar_select %p211, %s212, %s213
      %p217 = pneg %p211
      %p218 = scmp.eq.s32.totalorder %s22, 1
      %p219 = por %p217, %p218
      %p220 = scmp.ne.s32.totalorder %s212, %s215
      %p221 = scmp.eq.s32.totalorder %s22, 0
      %p222 = por %p220, %p221
      %p223 = scmp.ne.s32.totalorder %s212, %s215
      %p224 = scmp.eq.s32.totalorder %s27, 1
      %p225 = por %p223, %p224
      %p226 = scmp.ne.s32.totalorder %s215, %s216
      %p227 = scmp.eq.s32.totalorder %s27, 0
      %p228 = por %p226, %p227
      %p229 = scmp.ne.s32.totalorder %s215, %s216
      %p230 = scmp.eq.s32.totalorder %s28, 1
      %p231 = por %p229, %p230
      %p233 = scmp.ne.s32.totalorder %s216, %s232
      %p234 = scmp.eq.s32.totalorder %s28, 0
      %p235 = por %p233, %p234
      %p236 = scmp.le.s32.totalorder 1, %s22
      %p237 = scmp.lt.s32.totalorder %s22, 3
      %p238 = pnand %p236, %p237
      %p239 = pneg %p238
      // Predicated region
      $region9: #{tpu_custom_call.1} parent=5 // pred_check
        _
      $region10: #{tpu_custom_call.1} parent=5 // pred_check_branch
        %241 = sbr.rel (%p238) target = $region12
      $region11: #{tpu_custom_call.1} parent=5 // pred_region
        %s242 = ssub.s32 %s22, 1
        // Predicated region
        $region13: #{tpu_custom_call.1} parent=11 // pred_check
          %p243 = pneg %p137
        $region14: #{tpu_custom_call.1} parent=11 // pred_check_branch
          %245 = sbr.rel (%p243) target = $region16
        $region15: #{tpu_custom_call.1} parent=11 // pred_region
          _
        $region16: #{tpu_custom_call.1} parent=11 // pred_fallthru
          _
        // Predicated region
        $region17: #{tpu_custom_call.1} parent=11 // pred_check
          %p246 = pneg %p158
        $region18: #{tpu_custom_call.1} parent=11 // pred_check_branch
          %248 = sbr.rel (%p246) target = $region20
        $region19: #{tpu_custom_call.1} parent=11 // pred_region
          _
        $region20: #{tpu_custom_call.1} parent=11 // pred_fallthru
          _
        // Predicated region
        $region21: #{tpu_custom_call.1} parent=11 // pred_check
          %p249 = pneg %p179
        $region22: #{tpu_custom_call.1} parent=11 // pred_check_branch
          %251 = sbr.rel (%p249) target = $region24
        $region23: #{tpu_custom_call.1} parent=11 // pred_region
          _
        $region24: #{tpu_custom_call.1} parent=11 // pred_fallthru
          _
        // Predicated region
        $region25: #{tpu_custom_call.1} parent=11 // pred_check
          %p252 = pneg %p200
        $region26: #{tpu_custom_call.1} parent=11 // pred_check_branch
          %254 = sbr.rel (%p252) target = $region28
        $region27: #{tpu_custom_call.1} parent=11 // pred_region
          _
        $region28: #{tpu_custom_call.1} parent=11 // pred_fallthru
          _
      $region12: #{tpu_custom_call.1} parent=5 // pred_fallthru
        _
      %p255 = scmp.lt.s32.totalorder %s22, 2
      // Predicated region
      $region29: #{tpu_custom_call.1} parent=5 // pred_check
        %p256 = pneg %p255
      $region30: #{tpu_custom_call.1} parent=5 // pred_check_branch
        %258 = sbr.rel (%p256) target = $region32
      $region31: #{tpu_custom_call.1} parent=5 // pred_region
        // Predicated region
        $region33: #{tpu_custom_call.1} parent=31 // pred_check
          %p259 = pneg %p56
        $region34: #{tpu_custom_call.1} parent=31 // pred_check_branch
          %261 = sbr.rel (%p259) target = $region36
        $region35: #{tpu_custom_call.1} parent=31 // pred_region
          %s262 = sand.u32 %s46, 1
          %s263 = scalar_lea.sflag [#allocation3], %s262
          %s264 = sand.u32 %s46, 1
          %s265 = smul.addr %s264, 256
          %s266 = scalar_lea.vmem [#allocation2], %s265
          %s267 = smul.u32 32, %s30
          %s269 = ssub.s32 4096, 4096
          %270 = vsyncadd %s263, %s269
          %s271 = smul.addr %s29, 32
          %s272 = sadd.s32 %s267, %s271
          %s273 = smul.addr %s272, 128
          %s274 = scalar_lea.hbm %s0, %s273
          %s275 = sshll.u32 %s266, 4
          %s276 = int_to_ptr.vmem [resolvable:$true] %s275
          %281 = dma.hbm_to_vmem [thread:$0]  %s274, 4096, %s276, %s263, 128, 128, 8
        $region36: #{tpu_custom_call.1} parent=31 // pred_fallthru
          _
        // Predicated region
        $region37: #{tpu_custom_call.1} parent=31 // pred_check
          %p282 = pneg %p84
        $region38: #{tpu_custom_call.1} parent=31 // pred_check_branch
          %284 = sbr.rel (%p282) target = $region40
        $region39: #{tpu_custom_call.1} parent=31 // pred_region
          %s285 = sand.u32 %s74, 1
          %s286 = scalar_lea.sflag [#allocation6], %s285
          %s287 = sand.u32 %s74, 1
          %s288 = smul.addr %s287, 256
          %s289 = scalar_lea.vmem [#allocation5], %s288
          %s290 = smul.u32 32, %s30
          %s292 = ssub.s32 4096, 4096
          %293 = vsyncadd %s286, %s292
          %s294 = smul.addr %s29, 32
          %s295 = sadd.s32 %s290, %s294
          %s296 = smul.addr %s295, 128
          %s297 = scalar_lea.hbm %s1, %s296
          %s298 = sshll.u32 %s289, 4
          %s299 = int_to_ptr.vmem [resolvable:$true] %s298
          %304 = dma.hbm_to_vmem [thread:$0]  %s297, 4096, %s299, %s286, 128, 128, 8
        $region40: #{tpu_custom_call.1} parent=31 // pred_fallthru
          _
        // Predicated region
        $region41: #{tpu_custom_call.1} parent=31 // pred_check
          %p305 = pneg %p110
        $region42: #{tpu_custom_call.1} parent=31 // pred_check_branch
          %307 = sbr.rel (%p305) target = $region44
        $region43: #{tpu_custom_call.1} parent=31 // pred_region
          %p308 = scmp.lt.s32.totalorder %s29, 1
          %s309 = scalar_select %p308, %s29, 1
          %s310 = scalar_lea.vmem %s2, %s309
        $region44: #{tpu_custom_call.1} parent=31 // pred_fallthru
          _
      $region32: #{tpu_custom_call.1} parent=5 // pred_fallthru
        _
      %p311 = scmp.le.s32.totalorder 1, %s22
      %p312 = scmp.lt.s32.totalorder %s22, 3
      %p313 = pnand %p311, %p312
      %p314 = pneg %p313
      // Predicated region
      $region45: #{tpu_custom_call.1} parent=5 // pred_check
        _
      $region46: #{tpu_custom_call.1} parent=5 // pred_check_branch
        %316 = sbr.rel (%p313) target = $region48
      $region47: #{tpu_custom_call.1} parent=5 // pred_region
        %s317 = ssub.s32 %s22, 1
        %s318 = sand.u32 %s49, 1
        %s319 = scalar_lea.sflag [#allocation3], %s318
        %s320 = sand.u32 %s49, 1
        %s321 = smul.addr %s320, 256
        %s322 = scalar_lea.vmem [#allocation2], %s321
        // Predicated region
        $region49: #{tpu_custom_call.1} parent=47 // pred_check
          %p323 = pneg %p62
        $region50: #{tpu_custom_call.1} parent=47 // pred_check_branch
          %325 = sbr.rel (%p323) target = $region52
        $region51: #{tpu_custom_call.1} parent=47 // pred_region
          %326 = dma.done %s319, 4096
        $region52: #{tpu_custom_call.1} parent=47 // pred_fallthru
          _
        %s327 = sand.u32 %s77, 1
        %s328 = scalar_lea.sflag [#allocation6], %s327
        %s329 = sand.u32 %s77, 1
        %s330 = smul.addr %s329, 256
        %s331 = scalar_lea.vmem [#allocation5], %s330
        // Predicated region
        $region53: #{tpu_custom_call.1} parent=47 // pred_check
          %p332 = pneg %p90
        $region54: #{tpu_custom_call.1} parent=47 // pred_check_branch
          %334 = sbr.rel (%p332) target = $region56
        $region55: #{tpu_custom_call.1} parent=47 // pred_region
          %335 = dma.done %s328, 4096
        $region56: #{tpu_custom_call.1} parent=47 // pred_fallthru
          _
        %s336 = sand.u32 %s49, 1
        %s337 = scalar_lea.sflag [#allocation3], %s336
        %s338 = sand.u32 %s49, 1
        %s339 = smul.addr %s338, 256
        %s340 = scalar_lea.vmem [#allocation2], %s339
        %p341 = pneg %p62
        %p342 = pneg %p59
        %s343 = sand.u32 %s77, 1
        %s344 = scalar_lea.sflag [#allocation6], %s343
        %s345 = sand.u32 %s77, 1
        %s346 = smul.addr %s345, 256
        %s347 = scalar_lea.vmem [#allocation5], %s346
        %p348 = pneg %p90
        %p349 = pneg %p87
        %p350 = scmp.lt.s32.totalorder %s31, 1
        %s351 = scalar_select %p350, %s31, 1
        %s352 = scalar_lea.vmem %s2, %s351
        %p353 = pneg %p116
        %p354 = pneg %p113
        %p355 = pneg %p137
        %p356 = pneg %p134
        %p357 = pneg %p158
        %p358 = pneg %p155
        %p359 = pneg %p179
        %p360 = pneg %p176
        %p361 = pneg %p200
        %p362 = pneg %p197
        %p363 = pneg %p228
        %p364 = pneg %p225
        %s365 = sand.u32 %s215, 1
        %s366 = scalar_lea.sflag [#allocation4], %s365
        %s367 = sand.u32 %s215, 1
        %s368 = smul.addr %s367, 256
        %s369 = scalar_lea.vmem [#allocation7], %s368
        %s370 = smul.u32 32, %s32
        %s371 = smul.u32 32, %s32
        %p372 = scmp.lt.s32.totalorder %s31, 1
        %s373 = scalar_select %p372, %s31, 1
        %s374 = scalar_lea.vmem %s2, %s373
        %s375 = smul.u32 32, %s32
        %v377 = vld [vmem:[%s322] sm:$0xff]
        %v378 = vld [vmem:[%s322 + $0x8] sm:$0xff]
        %v379 = vld [vmem:[%s322 + $0x10] sm:$0xff]
        %v380 = vld [vmem:[%s322 + $0x18] sm:$0xff]
        %v381 = vld [vmem:[%s322 + $0x20] sm:$0xff]
        %v382 = vld [vmem:[%s322 + $0x28] sm:$0xff]
        %v383 = vld [vmem:[%s322 + $0x30] sm:$0xff]
        %v384 = vld [vmem:[%s322 + $0x38] sm:$0xff]
        %v385 = vld [vmem:[%s322 + $0x40] sm:$0xff]
        %v386 = vld [vmem:[%s322 + $0x48] sm:$0xff]
        %v387 = vld [vmem:[%s322 + $0x50] sm:$0xff]
        %v388 = vld [vmem:[%s322 + $0x58] sm:$0xff]
        %v389 = vld [vmem:[%s322 + $0x60] sm:$0xff]
        %v390 = vld [vmem:[%s322 + $0x68] sm:$0xff]
        %v391 = vld [vmem:[%s322 + $0x70] sm:$0xff]
        %v392 = vld [vmem:[%s322 + $0x78] sm:$0xff]
        %v393 = vld [vmem:[%s322 + $0x80] sm:$0xff]
        %v394 = vld [vmem:[%s322 + $0x88] sm:$0xff]
        %v395 = vld [vmem:[%s322 + $0x90] sm:$0xff]
        %v396 = vld [vmem:[%s322 + $0x98] sm:$0xff]
        %v397 = vld [vmem:[%s322 + $0xa0] sm:$0xff]
        %v398 = vld [vmem:[%s322 + $0xa8] sm:$0xff]
        %v399 = vld [vmem:[%s322 + $0xb0] sm:$0xff]
        %v400 = vld [vmem:[%s322 + $0xb8] sm:$0xff]
        %v401 = vld [vmem:[%s322 + $0xc0] sm:$0xff]
        %v402 = vld [vmem:[%s322 + $0xc8] sm:$0xff]
        %v403 = vld [vmem:[%s322 + $0xd0] sm:$0xff]
        %v404 = vld [vmem:[%s322 + $0xd8] sm:$0xff]
        %v405 = vld [vmem:[%s322 + $0xe0] sm:$0xff]
        %v406 = vld [vmem:[%s322 + $0xe8] sm:$0xff]
        %v407 = vld [vmem:[%s322 + $0xf0] sm:$0xff]
        %v408 = vld [vmem:[%s322 + $0xf8] sm:$0xff]
        %v409 = vld [vmem:[%s331] sm:$0xff]
        %v410 = vld [vmem:[%s331 + $0x8] sm:$0xff]
        %v411 = vld [vmem:[%s331 + $0x10] sm:$0xff]
        %v412 = vld [vmem:[%s331 + $0x18] sm:$0xff]
        %v413 = vld [vmem:[%s331 + $0x20] sm:$0xff]
        %v414 = vld [vmem:[%s331 + $0x28] sm:$0xff]
        %v415 = vld [vmem:[%s331 + $0x30] sm:$0xff]
        %v416 = vld [vmem:[%s331 + $0x38] sm:$0xff]
        %v417 = vld [vmem:[%s331 + $0x40] sm:$0xff]
        %v418 = vld [vmem:[%s331 + $0x48] sm:$0xff]
        %v419 = vld [vmem:[%s331 + $0x50] sm:$0xff]
        %v420 = vld [vmem:[%s331 + $0x58] sm:$0xff]
        %v421 = vld [vmem:[%s331 + $0x60] sm:$0xff]
        %v422 = vld [vmem:[%s331 + $0x68] sm:$0xff]
        %v423 = vld [vmem:[%s331 + $0x70] sm:$0xff]
        %v424 = vld [vmem:[%s331 + $0x78] sm:$0xff]
        %v425 = vld [vmem:[%s331 + $0x80] sm:$0xff]
        %v426 = vld [vmem:[%s331 + $0x88] sm:$0xff]
        %v427 = vld [vmem:[%s331 + $0x90] sm:$0xff]
        %v428 = vld [vmem:[%s331 + $0x98] sm:$0xff]
        %v429 = vld [vmem:[%s331 + $0xa0] sm:$0xff]
        %v430 = vld [vmem:[%s331 + $0xa8] sm:$0xff]
        %v431 = vld [vmem:[%s331 + $0xb0] sm:$0xff]
        %v432 = vld [vmem:[%s331 + $0xb8] sm:$0xff]
        %v433 = vld [vmem:[%s331 + $0xc0] sm:$0xff]
        %v434 = vld [vmem:[%s331 + $0xc8] sm:$0xff]
        %v435 = vld [vmem:[%s331 + $0xd0] sm:$0xff]
        %v436 = vld [vmem:[%s331 + $0xd8] sm:$0xff]
        %v437 = vld [vmem:[%s331 + $0xe0] sm:$0xff]
        %v438 = vld [vmem:[%s331 + $0xe8] sm:$0xff]
        %v439 = vld [vmem:[%s331 + $0xf0] sm:$0xff]
        %v440 = vld [vmem:[%s331 + $0xf8] sm:$0xff]
        %v441 = vadd.f32 %v377, %v409
        %v442 = vadd.f32 %v378, %v410
        %v443 = vadd.f32 %v379, %v411
        %v444 = vadd.f32 %v380, %v412
        %v445 = vadd.f32 %v381, %v413
        %v446 = vadd.f32 %v382, %v414
        %v447 = vadd.f32 %v383, %v415
        %v448 = vadd.f32 %v384, %v416
        %v449 = vadd.f32 %v385, %v417
        %v450 = vadd.f32 %v386, %v418
        %v451 = vadd.f32 %v387, %v419
        %v452 = vadd.f32 %v388, %v420
        %v453 = vadd.f32 %v389, %v421
        %v454 = vadd.f32 %v390, %v422
        %v455 = vadd.f32 %v391, %v423
        %v456 = vadd.f32 %v392, %v424
        %v457 = vadd.f32 %v393, %v425
        %v458 = vadd.f32 %v394, %v426
        %v459 = vadd.f32 %v395, %v427
        %v460 = vadd.f32 %v396, %v428
        %v461 = vadd.f32 %v397, %v429
        %v462 = vadd.f32 %v398, %v430
        %v463 = vadd.f32 %v399, %v431
        %v464 = vadd.f32 %v400, %v432
        %v465 = vadd.f32 %v401, %v433
        %v466 = vadd.f32 %v402, %v434
        %v467 = vadd.f32 %v403, %v435
        %v468 = vadd.f32 %v404, %v436
        %v469 = vadd.f32 %v405, %v437
        %v470 = vadd.f32 %v406, %v438
        %v471 = vadd.f32 %v407, %v439
        %v472 = vadd.f32 %v408, %v440
        %v473 = vpack.c.bf16 %v442, %v441
        %v474 = vpack.c.bf16 %v444, %v443
        %v475 = vpack.c.bf16 %v446, %v445
        %v476 = vpack.c.bf16 %v448, %v447
        %v477 = vpack.c.bf16 %v450, %v449
        %v478 = vpack.c.bf16 %v452, %v451
        %v479 = vpack.c.bf16 %v454, %v453
        %v480 = vpack.c.bf16 %v456, %v455
        %v481 = vpack.c.bf16 %v458, %v457
        %v482 = vpack.c.bf16 %v460, %v459
        %v483 = vpack.c.bf16 %v462, %v461
        %v484 = vpack.c.bf16 %v464, %v463
        %v485 = vpack.c.bf16 %v466, %v465
        %v486 = vpack.c.bf16 %v468, %v467
        %v487 = vpack.c.bf16 %v470, %v469
        %v488 = vpack.c.bf16 %v472, %v471
        %v489 = vld [vmem:[%s3] sm:$0xf]
        %v490 = vld [vmem:[%s3 + $0x4] sm:$0xf]
        %v491 = vld [vmem:[%s3 + $0x8] sm:$0xf]
        %v492 = vld [vmem:[%s3 + $0xc] sm:$0xf]
        %v493 = vld [vmem:[%s3 + $0x10] sm:$0xf]
        %v494 = vld [vmem:[%s3 + $0x14] sm:$0xf]
        %v495 = vld [vmem:[%s3 + $0x18] sm:$0xf]
        %v496 = vld [vmem:[%s3 + $0x1c] sm:$0xf]
        %v497 = vld [vmem:[%s3 + $0x20] sm:$0xf]
        %v498 = vld [vmem:[%s3 + $0x24] sm:$0xf]
        %v499 = vld [vmem:[%s3 + $0x28] sm:$0xf]
        %v500 = vld [vmem:[%s3 + $0x2c] sm:$0xf]
        %v501 = vld [vmem:[%s3 + $0x30] sm:$0xf]
        %v502 = vld [vmem:[%s3 + $0x34] sm:$0xf]
        %v503 = vld [vmem:[%s3 + $0x38] sm:$0xf]
        %v504 = vld [vmem:[%s3 + $0x3c] sm:$0xf]
        %v505 = vld [vmem:[%s4] sm:$0x1]
        %v507 = vlaneseq
        %v508 = vshrl.u32 %v507, 7
        %v509 = vsub.s32 0, %v508
        %v510 = vrot.slane %v505, %v509
        %v528 = vunpack.c.l.b16 %v489
        %v529 = vunpack.c.l.b16 %v490
        %v530 = vunpack.c.l.b16 %v491
        %v531 = vunpack.c.l.b16 %v492
        %v532 = vunpack.c.l.b16 %v493
        %v533 = vunpack.c.l.b16 %v494
        %v534 = vunpack.c.l.b16 %v495
        %v535 = vunpack.c.l.b16 %v496
        %v536 = vunpack.c.l.b16 %v497
        %v537 = vunpack.c.l.b16 %v498
        %v538 = vunpack.c.l.b16 %v499
        %v539 = vunpack.c.l.b16 %v500
        %v540 = vunpack.c.l.b16 %v501
        %v541 = vunpack.c.l.b16 %v502
        %v542 = vunpack.c.l.b16 %v503
        %v543 = vunpack.c.l.b16 %v504
        %v544 = vpack.c.b16 %v529, %v528
        %v545 = vpack.c.b16 %v531, %v530
        %v546 = vpack.c.b16 %v533, %v532
        %v547 = vpack.c.b16 %v535, %v534
        %v548 = vpack.c.b16 %v537, %v536
        %v549 = vpack.c.b16 %v539, %v538
        %v550 = vpack.c.b16 %v541, %v540
        %v551 = vpack.c.b16 %v543, %v542
        %560 = vmatprep.subr.bf16.mxu0 0
        %561 = vmatpush1.bf16.msra.mxu0 %v544
        %562 = vmatprep.subr.bf16.mxu0 0
        %563 = vmatpush1.bf16.msra.mxu0 %v545
        %564 = vmatprep.subr.bf16.mxu0 0
        %565 = vmatpush1.bf16.msra.mxu0 %v546
        %566 = vmatprep.subr.bf16.mxu0 0
        %567 = vmatpush1.bf16.msra.mxu0 %v547
        %568 = vmatprep.subr.bf16.mxu0 0
        %569 = vmatpush1.bf16.msra.mxu0 %v548
        %570 = vmatprep.subr.bf16.mxu0 0
        %571 = vmatpush1.bf16.msra.mxu0 %v549
        %572 = vmatprep.subr.bf16.mxu0 0
        %573 = vmatpush1.bf16.msra.mxu0 %v550
        %574 = vmatprep.subr.bf16.mxu0 0
        %575 = vmatpush1.bf16.msra.mxu0 %v551
        %576 = vmatprep.subr.bf16.mxu0 0
        %577 = vmatpush1.bf16.msra.mxu0 0
        %578 = vmatprep.subr.bf16.mxu0 0
        %579 = vmatpush1.bf16.msra.mxu0 0
        %580 = vmatprep.subr.bf16.mxu0 0
        %581 = vmatpush1.bf16.msra.mxu0 0
        %582 = vmatprep.subr.bf16.mxu0 0
        %583 = vmatpush1.bf16.msra.mxu0 0
        %584 = vmatprep.subr.bf16.mxu0 0
        %585 = vmatpush1.bf16.msra.mxu0 0
        %586 = vmatprep.subr.bf16.mxu0 0
        %587 = vmatpush1.bf16.msra.mxu0 0
        %588 = vmatprep.subr.bf16.mxu0 0
        %589 = vmatpush1.bf16.msra.mxu0 0
        %590 = vmatprep.subr.bf16.mxu0 0
        %591 = vmatpush1.bf16.msra.mxu0 0
        %592 = vmatprep.mubr.bf16.mxu0 0
        %593 = vmatmul.mubr.bf16.gmra.mrb[0].mxu0 %v473
        %v594 = vpop.f32.mrb[0].mxu0
        %v595 = vadd.f32 %v510, %v594
        %v596 = vpop.f32.mrb[0].mxu0
        %v597 = vpop.f32.mrb[0].mxu0
        %v598 = vadd.f32 %v510, %v597
        %v599 = vpop.f32.mrb[0].mxu0
        %600 = vmatprep.mubr.bf16.mxu0 0
        %601 = vmatmul.mubr.bf16.gmra.mrb[0].mxu0 %v474
        %v602 = vpop.f32.mrb[0].mxu0
        %v603 = vadd.f32 %v510, %v602
        %v604 = vpop.f32.mrb[0].mxu0
        %v605 = vpop.f32.mrb[0].mxu0
        %v606 = vadd.f32 %v510, %v605
        %v607 = vpop.f32.mrb[0].mxu0
        %608 = vmatprep.mubr.bf16.mxu0 0
        %609 = vmatmul.mubr.bf16.gmra.mrb[0].mxu0 %v475
        %v610 = vpop.f32.mrb[0].mxu0
        %v611 = vadd.f32 %v510, %v610
        %v612 = vpop.f32.mrb[0].mxu0
        %v613 = vpop.f32.mrb[0].mxu0
        %v614 = vadd.f32 %v510, %v613
        %v615 = vpop.f32.mrb[0].mxu0
        %616 = vmatprep.mubr.bf16.mxu0 0
        %617 = vmatmul.mubr.bf16.gmra.mrb[0].mxu0 %v476
        %v618 = vpop.f32.mrb[0].mxu0
        %v619 = vadd.f32 %v510, %v618
        %v620 = vpop.f32.mrb[0].mxu0
        %v621 = vpop.f32.mrb[0].mxu0
        %v622 = vadd.f32 %v510, %v621
        %v623 = vpop.f32.mrb[0].mxu0
        %624 = vmatprep.mubr.bf16.mxu0 0
        %625 = vmatmul.mubr.bf16.gmra.mrb[0].mxu0 %v477
        %v626 = vpop.f32.mrb[0].mxu0
        %v627 = vadd.f32 %v510, %v626
        %v628 = vpop.f32.mrb[0].mxu0
        %v629 = vpop.f32.mrb[0].mxu0
        %v630 = vadd.f32 %v510, %v629
        %v631 = vpop.f32.mrb[0].mxu0
        %632 = vmatprep.mubr.bf16.mxu0 0
        %633 = vmatmul.mubr.bf16.gmra.mrb[0].mxu0 %v478
        %v634 = vpop.f32.mrb[0].mxu0
        %v635 = vadd.f32 %v510, %v634
        %v636 = vpop.f32.mrb[0].mxu0
        %v637 = vpop.f32.mrb[0].mxu0
        %v638 = vadd.f32 %v510, %v637
        %v639 = vpop.f32.mrb[0].mxu0
        %640 = vmatprep.mubr.bf16.mxu0 0
        %641 = vmatmul.mubr.bf16.gmra.mrb[0].mxu0 %v479
        %v642 = vpop.f32.mrb[0].mxu0
        %v643 = vadd.f32 %v510, %v642
        %v644 = vpop.f32.mrb[0].mxu0
        %v645 = vpop.f32.mrb[0].mxu0
        %v646 = vadd.f32 %v510, %v645
        %v647 = vpop.f32.mrb[0].mxu0
        %648 = vmatprep.mubr.bf16.mxu0 0
        %649 = vmatmul.mubr.bf16.gmra.mrb[0].mxu0 %v480
        %v650 = vpop.f32.mrb[0].mxu0
        %v651 = vadd.f32 %v510, %v650
        %v652 = vpop.f32.mrb[0].mxu0
        %v653 = vpop.f32.mrb[0].mxu0
        %v654 = vadd.f32 %v510, %v653
        %v655 = vpop.f32.mrb[0].mxu0
        %656 = vmatprep.mubr.bf16.mxu0 0
        %657 = vmatmul.mubr.bf16.gmra.mrb[0].mxu0 %v481
        %v658 = vpop.f32.mrb[0].mxu0
        %v659 = vadd.f32 %v510, %v658
        %v660 = vpop.f32.mrb[0].mxu0
        %v661 = vpop.f32.mrb[0].mxu0
        %v662 = vadd.f32 %v510, %v661
        %v663 = vpop.f32.mrb[0].mxu0
        %664 = vmatprep.mubr.bf16.mxu0 0
        %665 = vmatmul.mubr.bf16.gmra.mrb[0].mxu0 %v482
        %v666 = vpop.f32.mrb[0].mxu0
        %v667 = vadd.f32 %v510, %v666
        %v668 = vpop.f32.mrb[0].mxu0
        %v669 = vpop.f32.mrb[0].mxu0
        %v670 = vadd.f32 %v510, %v669
        %v671 = vpop.f32.mrb[0].mxu0
        %672 = vmatprep.mubr.bf16.mxu0 0
        %673 = vmatmul.mubr.bf16.gmra.mrb[0].mxu0 %v483
        %v674 = vpop.f32.mrb[0].mxu0
        %v675 = vadd.f32 %v510, %v674
        %v676 = vpop.f32.mrb[0].mxu0
        %v677 = vpop.f32.mrb[0].mxu0
        %v678 = vadd.f32 %v510, %v677
        %v679 = vpop.f32.mrb[0].mxu0
        %680 = vmatprep.mubr.bf16.mxu0 0
        %681 = vmatmul.mubr.bf16.gmra.mrb[0].mxu0 %v484
        %v682 = vpop.f32.mrb[0].mxu0
        %v683 = vadd.f32 %v510, %v682
        %v684 = vpop.f32.mrb[0].mxu0
        %v685 = vpop.f32.mrb[0].mxu0
        %v686 = vadd.f32 %v510, %v685
        %v687 = vpop.f32.mrb[0].mxu0
        %688 = vmatprep.mubr.bf16.mxu0 0
        %689 = vmatmul.mubr.bf16.gmra.mrb[0].mxu0 %v485
        %v690 = vpop.f32.mrb[0].mxu0
        %v691 = vadd.f32 %v510, %v690
        %v692 = vpop.f32.mrb[0].mxu0
        %v693 = vpop.f32.mrb[0].mxu0
        %v694 = vadd.f32 %v510, %v693
        %v695 = vpop.f32.mrb[0].mxu0
        %696 = vmatprep.mubr.bf16.mxu0 0
        %697 = vmatmul.mubr.bf16.gmra.mrb[0].mxu0 %v486
        %v698 = vpop.f32.mrb[0].mxu0
        %v699 = vadd.f32 %v510, %v698
        %v700 = vpop.f32.mrb[0].mxu0
        %v701 = vpop.f32.mrb[0].mxu0
        %v702 = vadd.f32 %v510, %v701
        %v703 = vpop.f32.mrb[0].mxu0
        %704 = vmatprep.mubr.bf16.mxu0 0
        %705 = vmatmul.mubr.bf16.gmra.mrb[0].mxu0 %v487
        %v706 = vpop.f32.mrb[0].mxu0
        %v707 = vadd.f32 %v510, %v706
        %v708 = vpop.f32.mrb[0].mxu0
        %v709 = vpop.f32.mrb[0].mxu0
        %v710 = vadd.f32 %v510, %v709
        %v711 = vpop.f32.mrb[0].mxu0
        %712 = vmatprep.mubr.bf16.mxu0 0
        %713 = vmatmul.mubr.bf16.gmra.mrb[0].mxu0 %v488
        %v714 = vpop.f32.mrb[0].mxu0
        %v715 = vadd.f32 %v510, %v714
        %v716 = vpop.f32.mrb[0].mxu0
        %v717 = vpop.f32.mrb[0].mxu0
        %v718 = vadd.f32 %v510, %v717
        %v719 = vpop.f32.mrb[0].mxu0
        %720 = vdwg.mxu0
        %v721 = vmax.f32 %v595, 0.0
        %v722 = vmax.f32 %v598, 0.0
        %v723 = vmax.f32 %v603, 0.0
        %v724 = vmax.f32 %v606, 0.0
        %v725 = vmax.f32 %v611, 0.0
        %v726 = vmax.f32 %v614, 0.0
        %v727 = vmax.f32 %v619, 0.0
        %v728 = vmax.f32 %v622, 0.0
        %v729 = vmax.f32 %v627, 0.0
        %v730 = vmax.f32 %v630, 0.0
        %v731 = vmax.f32 %v635, 0.0
        %v732 = vmax.f32 %v638, 0.0
        %v733 = vmax.f32 %v643, 0.0
        %v734 = vmax.f32 %v646, 0.0
        %v735 = vmax.f32 %v651, 0.0
        %v736 = vmax.f32 %v654, 0.0
        %v737 = vmax.f32 %v659, 0.0
        %v738 = vmax.f32 %v662, 0.0
        %v739 = vmax.f32 %v667, 0.0
        %v740 = vmax.f32 %v670, 0.0
        %v741 = vmax.f32 %v675, 0.0
        %v742 = vmax.f32 %v678, 0.0
        %v743 = vmax.f32 %v683, 0.0
        %v744 = vmax.f32 %v686, 0.0
        %v745 = vmax.f32 %v691, 0.0
        %v746 = vmax.f32 %v694, 0.0
        %v747 = vmax.f32 %v699, 0.0
        %v748 = vmax.f32 %v702, 0.0
        %v749 = vmax.f32 %v707, 0.0
        %v750 = vmax.f32 %v710, 0.0
        %v751 = vmax.f32 %v715, 0.0
        %v752 = vmax.f32 %v718, 0.0
        %v753 = vpack.c.bf16 %v722, %v721
        %v754 = vpack.c.bf16 %v724, %v723
        %v755 = vpack.c.bf16 %v726, %v725
        %v756 = vpack.c.bf16 %v728, %v727
        %v757 = vpack.c.bf16 %v730, %v729
        %v758 = vpack.c.bf16 %v732, %v731
        %v759 = vpack.c.bf16 %v734, %v733
        %v760 = vpack.c.bf16 %v736, %v735
        %v761 = vpack.c.bf16 %v738, %v737
        %v762 = vpack.c.bf16 %v740, %v739
        %v763 = vpack.c.bf16 %v742, %v741
        %v764 = vpack.c.bf16 %v744, %v743
        %v765 = vpack.c.bf16 %v746, %v745
        %v766 = vpack.c.bf16 %v748, %v747
        %v767 = vpack.c.bf16 %v750, %v749
        %v768 = vpack.c.bf16 %v752, %v751
        %v769 = vld [vmem:[%s5] sm:$0xf]
        %v770 = vld [vmem:[%s5 + $0x4] sm:$0xf]
        %v771 = vld [vmem:[%s5 + $0x8] sm:$0xf]
        %v772 = vld [vmem:[%s5 + $0xc] sm:$0xf]
        %v773 = vld [vmem:[%s6] sm:$0x1]
        %v775 = vlaneseq
        %v776 = vshrl.u32 %v775, 7
        %v777 = vsub.s32 0, %v776
        %v778 = vrot.slane %v773, %v777
        %v784 = vunpack.c.l.b16 %v769
        %v785 = vunpack.c.l.b16 %v770
        %v786 = vunpack.c.l.b16 %v771
        %v787 = vunpack.c.l.b16 %v772
        %v788 = vpack.c.b16 %v785, %v784
        %v789 = vpack.c.b16 %v787, %v786
        %vm792 = vcmask 261120
        %v794 = vsel %vm792, %v753, 0
        %v797 = vsel %vm792, %v754, 0
        %v800 = vsel %vm792, %v755, 0
        %v803 = vsel %vm792, %v756, 0
        %v806 = vsel %vm792, %v757, 0
        %v809 = vsel %vm792, %v758, 0
        %v812 = vsel %vm792, %v759, 0
        %v815 = vsel %vm792, %v760, 0
        %v818 = vsel %vm792, %v761, 0
        %v821 = vsel %vm792, %v762, 0
        %v824 = vsel %vm792, %v763, 0
        %v827 = vsel %vm792, %v764, 0
        %v830 = vsel %vm792, %v765, 0
        %v833 = vsel %vm792, %v766, 0
        %v836 = vsel %vm792, %v767, 0
        %v839 = vsel %vm792, %v768, 0
        %841 = vmatprep.subr.bf16.mxu0 0
        %842 = vmatpush1.bf16.msra.mxu0 %v788
        %843 = vmatprep.subr.bf16.mxu0 0
        %844 = vmatpush1.bf16.msra.mxu0 %v789
        %845 = vmatprep.subr.bf16.mxu0 0
        %846 = vmatpush1.bf16.msra.mxu0 0
        %847 = vmatprep.subr.bf16.mxu0 0
        %848 = vmatpush1.bf16.msra.mxu0 0
        %849 = vmatprep.subr.bf16.mxu0 0
        %850 = vmatpush1.bf16.msra.mxu0 0
        %851 = vmatprep.subr.bf16.mxu0 0
        %852 = vmatpush1.bf16.msra.mxu0 0
        %853 = vmatprep.subr.bf16.mxu0 0
        %854 = vmatpush1.bf16.msra.mxu0 0
        %855 = vmatprep.subr.bf16.mxu0 0
        %856 = vmatpush1.bf16.msra.mxu0 0
        %857 = vmatprep.subr.bf16.mxu0 0
        %858 = vmatpush1.bf16.msra.mxu0 0
        %859 = vmatprep.subr.bf16.mxu0 0
        %860 = vmatpush1.bf16.msra.mxu0 0
        %861 = vmatprep.subr.bf16.mxu0 0
        %862 = vmatpush1.bf16.msra.mxu0 0
        %863 = vmatprep.subr.bf16.mxu0 0
        %864 = vmatpush1.bf16.msra.mxu0 0
        %865 = vmatprep.subr.bf16.mxu0 0
        %866 = vmatpush1.bf16.msra.mxu0 0
        %867 = vmatprep.subr.bf16.mxu0 0
        %868 = vmatpush1.bf16.msra.mxu0 0
        %869 = vmatprep.subr.bf16.mxu0 0
        %870 = vmatpush1.bf16.msra.mxu0 0
        %871 = vmatprep.subr.bf16.mxu0 0
        %872 = vmatpush1.bf16.msra.mxu0 0
        %873 = vmatprep.mubr.bf16.mxu0 0
        %874 = vmatmul.mubr.bf16.gmra.mrb[0].mxu0 %v794
        %v875 = vpop.f32.mrb[0].mxu0
        %v876 = vadd.f32 %v778, %v875
        %v877 = vpop.f32.mrb[0].mxu0
        %v878 = vpop.f32.mrb[0].mxu0
        %v879 = vadd.f32 %v778, %v878
        %v880 = vpop.f32.mrb[0].mxu0
        %881 = vmatprep.mubr.bf16.mxu0 0
        %882 = vmatmul.mubr.bf16.gmra.mrb[0].mxu0 %v797
        %v883 = vpop.f32.mrb[0].mxu0
        %v884 = vadd.f32 %v778, %v883
        %v885 = vpop.f32.mrb[0].mxu0
        %v886 = vpop.f32.mrb[0].mxu0
        %v887 = vadd.f32 %v778, %v886
        %v888 = vpop.f32.mrb[0].mxu0
        %889 = vmatprep.mubr.bf16.mxu0 0
        %890 = vmatmul.mubr.bf16.gmra.mrb[0].mxu0 %v800
        %v891 = vpop.f32.mrb[0].mxu0
        %v892 = vadd.f32 %v778, %v891
        %v893 = vpop.f32.mrb[0].mxu0
        %v894 = vpop.f32.mrb[0].mxu0
        %v895 = vadd.f32 %v778, %v894
        %v896 = vpop.f32.mrb[0].mxu0
        %897 = vmatprep.mubr.bf16.mxu0 0
        %898 = vmatmul.mubr.bf16.gmra.mrb[0].mxu0 %v803
        %v899 = vpop.f32.mrb[0].mxu0
        %v900 = vadd.f32 %v778, %v899
        %v901 = vpop.f32.mrb[0].mxu0
        %v902 = vpop.f32.mrb[0].mxu0
        %v903 = vadd.f32 %v778, %v902
        %v904 = vpop.f32.mrb[0].mxu0
        %905 = vmatprep.mubr.bf16.mxu0 0
        %906 = vmatmul.mubr.bf16.gmra.mrb[0].mxu0 %v806
        %v907 = vpop.f32.mrb[0].mxu0
        %v908 = vadd.f32 %v778, %v907
        %v909 = vpop.f32.mrb[0].mxu0
        %v910 = vpop.f32.mrb[0].mxu0
        %v911 = vadd.f32 %v778, %v910
        %v912 = vpop.f32.mrb[0].mxu0
        %913 = vmatprep.mubr.bf16.mxu0 0
        %914 = vmatmul.mubr.bf16.gmra.mrb[0].mxu0 %v809
        %v915 = vpop.f32.mrb[0].mxu0
        %v916 = vadd.f32 %v778, %v915
        %v917 = vpop.f32.mrb[0].mxu0
        %v918 = vpop.f32.mrb[0].mxu0
        %v919 = vadd.f32 %v778, %v918
        %v920 = vpop.f32.mrb[0].mxu0
        %921 = vmatprep.mubr.bf16.mxu0 0
        %922 = vmatmul.mubr.bf16.gmra.mrb[0].mxu0 %v812
        %v923 = vpop.f32.mrb[0].mxu0
        %v924 = vadd.f32 %v778, %v923
        %v925 = vpop.f32.mrb[0].mxu0
        %v926 = vpop.f32.mrb[0].mxu0
        %v927 = vadd.f32 %v778, %v926
        %v928 = vpop.f32.mrb[0].mxu0
        %929 = vmatprep.mubr.bf16.mxu0 0
        %930 = vmatmul.mubr.bf16.gmra.mrb[0].mxu0 %v815
        %v931 = vpop.f32.mrb[0].mxu0
        %v932 = vadd.f32 %v778, %v931
        %v933 = vpop.f32.mrb[0].mxu0
        %v934 = vpop.f32.mrb[0].mxu0
        %v935 = vadd.f32 %v778, %v934
        %v936 = vpop.f32.mrb[0].mxu0
        %937 = vmatprep.mubr.bf16.mxu0 0
        %938 = vmatmul.mubr.bf16.gmra.mrb[0].mxu0 %v818
        %v939 = vpop.f32.mrb[0].mxu0
        %v940 = vadd.f32 %v778, %v939
        %v941 = vpop.f32.mrb[0].mxu0
        %v942 = vpop.f32.mrb[0].mxu0
        %v943 = vadd.f32 %v778, %v942
        %v944 = vpop.f32.mrb[0].mxu0
        %945 = vmatprep.mubr.bf16.mxu0 0
        %946 = vmatmul.mubr.bf16.gmra.mrb[0].mxu0 %v821
        %v947 = vpop.f32.mrb[0].mxu0
        %v948 = vadd.f32 %v778, %v947
        %v949 = vpop.f32.mrb[0].mxu0
        %v950 = vpop.f32.mrb[0].mxu0
        %v951 = vadd.f32 %v778, %v950
        %v952 = vpop.f32.mrb[0].mxu0
        %953 = vmatprep.mubr.bf16.mxu0 0
        %954 = vmatmul.mubr.bf16.gmra.mrb[0].mxu0 %v824
        %v955 = vpop.f32.mrb[0].mxu0
        %v956 = vadd.f32 %v778, %v955
        %v957 = vpop.f32.mrb[0].mxu0
        %v958 = vpop.f32.mrb[0].mxu0
        %v959 = vadd.f32 %v778, %v958
        %v960 = vpop.f32.mrb[0].mxu0
        %961 = vmatprep.mubr.bf16.mxu0 0
        %962 = vmatmul.mubr.bf16.gmra.mrb[0].mxu0 %v827
        %v963 = vpop.f32.mrb[0].mxu0
        %v964 = vadd.f32 %v778, %v963
        %v965 = vpop.f32.mrb[0].mxu0
        %v966 = vpop.f32.mrb[0].mxu0
        %v967 = vadd.f32 %v778, %v966
        %v968 = vpop.f32.mrb[0].mxu0
        %969 = vmatprep.mubr.bf16.mxu0 0
        %970 = vmatmul.mubr.bf16.gmra.mrb[0].mxu0 %v830
        %v971 = vpop.f32.mrb[0].mxu0
        %v972 = vadd.f32 %v778, %v971
        %v973 = vpop.f32.mrb[0].mxu0
        %v974 = vpop.f32.mrb[0].mxu0
        %v975 = vadd.f32 %v778, %v974
        %v976 = vpop.f32.mrb[0].mxu0
        %977 = vmatprep.mubr.bf16.mxu0 0
        %978 = vmatmul.mubr.bf16.gmra.mrb[0].mxu0 %v833
        %v979 = vpop.f32.mrb[0].mxu0
        %v980 = vadd.f32 %v778, %v979
        %v981 = vpop.f32.mrb[0].mxu0
        %v982 = vpop.f32.mrb[0].mxu0
        %v983 = vadd.f32 %v778, %v982
        %v984 = vpop.f32.mrb[0].mxu0
        %985 = vmatprep.mubr.bf16.mxu0 0
        %986 = vmatmul.mubr.bf16.gmra.mrb[0].mxu0 %v836
        %v987 = vpop.f32.mrb[0].mxu0
        %v988 = vadd.f32 %v778, %v987
        %v989 = vpop.f32.mrb[0].mxu0
        %v990 = vpop.f32.mrb[0].mxu0
        %v991 = vadd.f32 %v778, %v990
        %v992 = vpop.f32.mrb[0].mxu0
        %993 = vmatprep.mubr.bf16.mxu0 0
        %994 = vmatmul.mubr.bf16.gmra.mrb[0].mxu0 %v839
        %v995 = vpop.f32.mrb[0].mxu0
        %v996 = vadd.f32 %v778, %v995
        %v997 = vpop.f32.mrb[0].mxu0
        %v998 = vpop.f32.mrb[0].mxu0
        %v999 = vadd.f32 %v778, %v998
        %v1000 = vpop.f32.mrb[0].mxu0
        %1001 = vdwg.mxu0
        %v1002 = vld [vmem:[%s374] sm:$0x1]
        %v1004 = vlaneseq
        %v1005 = vshrl.u32 %v1004, 7
        %v1006 = vsub.s32 0, %v1005
        %v1007 = vrot.slane %v1002, %v1006
        %v1009 = vadd.f32 %v876, %v1007
        %v1010 = vadd.f32 %v879, %v1007
        %v1011 = vadd.f32 %v884, %v1007
        %v1012 = vadd.f32 %v887, %v1007
        %v1013 = vadd.f32 %v892, %v1007
        %v1014 = vadd.f32 %v895, %v1007
        %v1015 = vadd.f32 %v900, %v1007
        %v1016 = vadd.f32 %v903, %v1007
        %v1017 = vadd.f32 %v908, %v1007
        %v1018 = vadd.f32 %v911, %v1007
        %v1019 = vadd.f32 %v916, %v1007
        %v1020 = vadd.f32 %v919, %v1007
        %v1021 = vadd.f32 %v924, %v1007
        %v1022 = vadd.f32 %v927, %v1007
        %v1023 = vadd.f32 %v932, %v1007
        %v1024 = vadd.f32 %v935, %v1007
        %v1025 = vadd.f32 %v940, %v1007
        %v1026 = vadd.f32 %v943, %v1007
        %v1027 = vadd.f32 %v948, %v1007
        %v1028 = vadd.f32 %v951, %v1007
        %v1029 = vadd.f32 %v956, %v1007
        %v1030 = vadd.f32 %v959, %v1007
        %v1031 = vadd.f32 %v964, %v1007
        %v1032 = vadd.f32 %v967, %v1007
        %v1033 = vadd.f32 %v972, %v1007
        %v1034 = vadd.f32 %v975, %v1007
        %v1035 = vadd.f32 %v980, %v1007
        %v1036 = vadd.f32 %v983, %v1007
        %v1037 = vadd.f32 %v988, %v1007
        %v1038 = vadd.f32 %v991, %v1007
        %v1039 = vadd.f32 %v996, %v1007
        %v1040 = vadd.f32 %v999, %v1007
        %v1041 = vxor.u32 %v1009, 2147483648
        %v1042 = vxor.u32 %v1010, 2147483648
        %v1043 = vxor.u32 %v1011, 2147483648
        %v1044 = vxor.u32 %v1012, 2147483648
        %v1045 = vxor.u32 %v1013, 2147483648
        %v1046 = vxor.u32 %v1014, 2147483648
        %v1047 = vxor.u32 %v1015, 2147483648
        %v1048 = vxor.u32 %v1016, 2147483648
        %v1049 = vxor.u32 %v1017, 2147483648
        %v1050 = vxor.u32 %v1018, 2147483648
        %v1051 = vxor.u32 %v1019, 2147483648
        %v1052 = vxor.u32 %v1020, 2147483648
        %v1053 = vxor.u32 %v1021, 2147483648
        %v1054 = vxor.u32 %v1022, 2147483648
        %v1055 = vxor.u32 %v1023, 2147483648
        %v1056 = vxor.u32 %v1024, 2147483648
        %v1057 = vxor.u32 %v1025, 2147483648
        %v1058 = vxor.u32 %v1026, 2147483648
        %v1059 = vxor.u32 %v1027, 2147483648
        %v1060 = vxor.u32 %v1028, 2147483648
        %v1061 = vxor.u32 %v1029, 2147483648
        %v1062 = vxor.u32 %v1030, 2147483648
        %v1063 = vxor.u32 %v1031, 2147483648
        %v1064 = vxor.u32 %v1032, 2147483648
        %v1065 = vxor.u32 %v1033, 2147483648
        %v1066 = vxor.u32 %v1034, 2147483648
        %v1067 = vxor.u32 %v1035, 2147483648
        %v1068 = vxor.u32 %v1036, 2147483648
        %v1069 = vxor.u32 %v1037, 2147483648
        %v1070 = vxor.u32 %v1038, 2147483648
        %v1071 = vxor.u32 %v1039, 2147483648
        %v1072 = vxor.u32 %v1040, 2147483648
        %v1073 = vmul.f32 %v1041, 1.442695
        %v1074 = vpow.pop %v1073
        %v1075 = vmul.f32 %v1042, 1.442695
        %v1076 = vpow.pop %v1075
        %v1077 = vmul.f32 %v1043, 1.442695
        %v1078 = vpow.pop %v1077
        %v1079 = vmul.f32 %v1044, 1.442695
        %v1080 = vpow.pop %v1079
        %v1081 = vmul.f32 %v1045, 1.442695
        %v1082 = vpow.pop %v1081
        %v1083 = vmul.f32 %v1046, 1.442695
        %v1084 = vpow.pop %v1083
        %v1085 = vmul.f32 %v1047, 1.442695
        %v1086 = vpow.pop %v1085
        %v1087 = vmul.f32 %v1048, 1.442695
        %v1088 = vpow.pop %v1087
        %v1089 = vmul.f32 %v1049, 1.442695
        %v1090 = vpow.pop %v1089
        %v1091 = vmul.f32 %v1050, 1.442695
        %v1092 = vpow.pop %v1091
        %v1093 = vmul.f32 %v1051, 1.442695
        %v1094 = vpow.pop %v1093
        %v1095 = vmul.f32 %v1052, 1.442695
        %v1096 = vpow.pop %v1095
        %v1097 = vmul.f32 %v1053, 1.442695
        %v1098 = vpow.pop %v1097
        %v1099 = vmul.f32 %v1054, 1.442695
        %v1100 = vpow.pop %v1099
        %v1101 = vmul.f32 %v1055, 1.442695
        %v1102 = vpow.pop %v1101
        %v1103 = vmul.f32 %v1056, 1.442695
        %v1104 = vpow.pop %v1103
        %v1105 = vmul.f32 %v1057, 1.442695
        %v1106 = vpow.pop %v1105
        %v1107 = vmul.f32 %v1058, 1.442695
        %v1108 = vpow.pop %v1107
        %v1109 = vmul.f32 %v1059, 1.442695
        %v1110 = vpow.pop %v1109
        %v1111 = vmul.f32 %v1060, 1.442695
        %v1112 = vpow.pop %v1111
        %v1113 = vmul.f32 %v1061, 1.442695
        %v1114 = vpow.pop %v1113
        %v1115 = vmul.f32 %v1062, 1.442695
        %v1116 = vpow.pop %v1115
        %v1117 = vmul.f32 %v1063, 1.442695
        %v1118 = vpow.pop %v1117
        %v1119 = vmul.f32 %v1064, 1.442695
        %v1120 = vpow.pop %v1119
        %v1121 = vmul.f32 %v1065, 1.442695
        %v1122 = vpow.pop %v1121
        %v1123 = vmul.f32 %v1066, 1.442695
        %v1124 = vpow.pop %v1123
        %v1125 = vmul.f32 %v1067, 1.442695
        %v1126 = vpow.pop %v1125
        %v1127 = vmul.f32 %v1068, 1.442695
        %v1128 = vpow.pop %v1127
        %v1129 = vmul.f32 %v1069, 1.442695
        %v1130 = vpow.pop %v1129
        %v1131 = vmul.f32 %v1070, 1.442695
        %v1132 = vpow.pop %v1131
        %v1133 = vmul.f32 %v1071, 1.442695
        %v1134 = vpow.pop %v1133
        %v1135 = vmul.f32 %v1072, 1.442695
        %v1136 = vpow.pop %v1135
        %v1137 = vadd.f32 %v1074, 1.0
        %v1138 = vadd.f32 %v1076, 1.0
        %v1139 = vadd.f32 %v1078, 1.0
        %v1140 = vadd.f32 %v1080, 1.0
        %v1141 = vadd.f32 %v1082, 1.0
        %v1142 = vadd.f32 %v1084, 1.0
        %v1143 = vadd.f32 %v1086, 1.0
        %v1144 = vadd.f32 %v1088, 1.0
        %v1145 = vadd.f32 %v1090, 1.0
        %v1146 = vadd.f32 %v1092, 1.0
        %v1147 = vadd.f32 %v1094, 1.0
        %v1148 = vadd.f32 %v1096, 1.0
        %v1149 = vadd.f32 %v1098, 1.0
        %v1150 = vadd.f32 %v1100, 1.0
        %v1151 = vadd.f32 %v1102, 1.0
        %v1152 = vadd.f32 %v1104, 1.0
        %v1153 = vadd.f32 %v1106, 1.0
        %v1154 = vadd.f32 %v1108, 1.0
        %v1155 = vadd.f32 %v1110, 1.0
        %v1156 = vadd.f32 %v1112, 1.0
        %v1157 = vadd.f32 %v1114, 1.0
        %v1158 = vadd.f32 %v1116, 1.0
        %v1159 = vadd.f32 %v1118, 1.0
        %v1160 = vadd.f32 %v1120, 1.0
        %v1161 = vadd.f32 %v1122, 1.0
        %v1162 = vadd.f32 %v1124, 1.0
        %v1163 = vadd.f32 %v1126, 1.0
        %v1164 = vadd.f32 %v1128, 1.0
        %v1165 = vadd.f32 %v1130, 1.0
        %v1166 = vadd.f32 %v1132, 1.0
        %v1167 = vadd.f32 %v1134, 1.0
        %v1168 = vadd.f32 %v1136, 1.0
        %v1169 = vrcp.pop %v1137
        %v1170 = vmul.f32 1.0, %v1169
        %v1171 = vrcp.pop %v1138
        %v1172 = vmul.f32 1.0, %v1171
        %v1173 = vrcp.pop %v1139
        %v1174 = vmul.f32 1.0, %v1173
        %v1175 = vrcp.pop %v1140
        %v1176 = vmul.f32 1.0, %v1175
        %v1177 = vrcp.pop %v1141
        %v1178 = vmul.f32 1.0, %v1177
        %v1179 = vrcp.pop %v1142
        %v1180 = vmul.f32 1.0, %v1179
        %v1181 = vrcp.pop %v1143
        %v1182 = vmul.f32 1.0, %v1181
        %v1183 = vrcp.pop %v1144
        %v1184 = vmul.f32 1.0, %v1183
        %v1185 = vrcp.pop %v1145
        %v1186 = vmul.f32 1.0, %v1185
        %v1187 = vrcp.pop %v1146
        %v1188 = vmul.f32 1.0, %v1187
        %v1189 = vrcp.pop %v1147
        %v1190 = vmul.f32 1.0, %v1189
        %v1191 = vrcp.pop %v1148
        %v1192 = vmul.f32 1.0, %v1191
        %v1193 = vrcp.pop %v1149
        %v1194 = vmul.f32 1.0, %v1193
        %v1195 = vrcp.pop %v1150
        %v1196 = vmul.f32 1.0, %v1195
        %v1197 = vrcp.pop %v1151
        %v1198 = vmul.f32 1.0, %v1197
        %v1199 = vrcp.pop %v1152
        %v1200 = vmul.f32 1.0, %v1199
        %v1201 = vrcp.pop %v1153
        %v1202 = vmul.f32 1.0, %v1201
        %v1203 = vrcp.pop %v1154
        %v1204 = vmul.f32 1.0, %v1203
        %v1205 = vrcp.pop %v1155
        %v1206 = vmul.f32 1.0, %v1205
        %v1207 = vrcp.pop %v1156
        %v1208 = vmul.f32 1.0, %v1207
        %v1209 = vrcp.pop %v1157
        %v1210 = vmul.f32 1.0, %v1209
        %v1211 = vrcp.pop %v1158
        %v1212 = vmul.f32 1.0, %v1211
        %v1213 = vrcp.pop %v1159
        %v1214 = vmul.f32 1.0, %v1213
        %v1215 = vrcp.pop %v1160
        %v1216 = vmul.f32 1.0, %v1215
        %v1217 = vrcp.pop %v1161
        %v1218 = vmul.f32 1.0, %v1217
        %v1219 = vrcp.pop %v1162
        %v1220 = vmul.f32 1.0, %v1219
        %v1221 = vrcp.pop %v1163
        %v1222 = vmul.f32 1.0, %v1221
        %v1223 = vrcp.pop %v1164
        %v1224 = vmul.f32 1.0, %v1223
        %v1225 = vrcp.pop %v1165
        %v1226 = vmul.f32 1.0, %v1225
        %v1227 = vrcp.pop %v1166
        %v1228 = vmul.f32 1.0, %v1227
        %v1229 = vrcp.pop %v1167
        %v1230 = vmul.f32 1.0, %v1229
        %v1231 = vrcp.pop %v1168
        %v1232 = vmul.f32 1.0, %v1231
        %v1233 = vmul.f32 %v409, 2.0
        %v1234 = vmul.f32 %v410, 2.0
        %v1235 = vmul.f32 %v411, 2.0
        %v1236 = vmul.f32 %v412, 2.0
        %v1237 = vmul.f32 %v413, 2.0
        %v1238 = vmul.f32 %v414, 2.0
        %v1239 = vmul.f32 %v415, 2.0
        %v1240 = vmul.f32 %v416, 2.0
        %v1241 = vmul.f32 %v417, 2.0
        %v1242 = vmul.f32 %v418, 2.0
        %v1243 = vmul.f32 %v419, 2.0
        %v1244 = vmul.f32 %v420, 2.0
        %v1245 = vmul.f32 %v421, 2.0
        %v1246 = vmul.f32 %v422, 2.0
        %v1247 = vmul.f32 %v423, 2.0
        %v1248 = vmul.f32 %v424, 2.0
        %v1249 = vmul.f32 %v425, 2.0
        %v1250 = vmul.f32 %v426, 2.0
        %v1251 = vmul.f32 %v427, 2.0
        %v1252 = vmul.f32 %v428, 2.0
        %v1253 = vmul.f32 %v429, 2.0
        %v1254 = vmul.f32 %v430, 2.0
        %v1255 = vmul.f32 %v431, 2.0
        %v1256 = vmul.f32 %v432, 2.0
        %v1257 = vmul.f32 %v433, 2.0
        %v1258 = vmul.f32 %v434, 2.0
        %v1259 = vmul.f32 %v435, 2.0
        %v1260 = vmul.f32 %v436, 2.0
        %v1261 = vmul.f32 %v437, 2.0
        %v1262 = vmul.f32 %v438, 2.0
        %v1263 = vmul.f32 %v439, 2.0
        %v1264 = vmul.f32 %v440, 2.0
        %v1265 = vmul.f32 %v1170, 2.0
        %v1266 = vmul.f32 %v1172, 2.0
        %v1267 = vmul.f32 %v1174, 2.0
        %v1268 = vmul.f32 %v1176, 2.0
        %v1269 = vmul.f32 %v1178, 2.0
        %v1270 = vmul.f32 %v1180, 2.0
        %v1271 = vmul.f32 %v1182, 2.0
        %v1272 = vmul.f32 %v1184, 2.0
        %v1273 = vmul.f32 %v1186, 2.0
        %v1274 = vmul.f32 %v1188, 2.0
        %v1275 = vmul.f32 %v1190, 2.0
        %v1276 = vmul.f32 %v1192, 2.0
        %v1277 = vmul.f32 %v1194, 2.0
        %v1278 = vmul.f32 %v1196, 2.0
        %v1279 = vmul.f32 %v1198, 2.0
        %v1280 = vmul.f32 %v1200, 2.0
        %v1281 = vmul.f32 %v1202, 2.0
        %v1282 = vmul.f32 %v1204, 2.0
        %v1283 = vmul.f32 %v1206, 2.0
        %v1284 = vmul.f32 %v1208, 2.0
        %v1285 = vmul.f32 %v1210, 2.0
        %v1286 = vmul.f32 %v1212, 2.0
        %v1287 = vmul.f32 %v1214, 2.0
        %v1288 = vmul.f32 %v1216, 2.0
        %v1289 = vmul.f32 %v1218, 2.0
        %v1290 = vmul.f32 %v1220, 2.0
        %v1291 = vmul.f32 %v1222, 2.0
        %v1292 = vmul.f32 %v1224, 2.0
        %v1293 = vmul.f32 %v1226, 2.0
        %v1294 = vmul.f32 %v1228, 2.0
        %v1295 = vmul.f32 %v1230, 2.0
        %v1296 = vmul.f32 %v1232, 2.0
        %v1297 = vsub.f32 %v377, %v409
        %v1298 = vsub.f32 %v378, %v410
        %v1299 = vsub.f32 %v379, %v411
        %v1300 = vsub.f32 %v380, %v412
        %v1301 = vsub.f32 %v381, %v413
        %v1302 = vsub.f32 %v382, %v414
        %v1303 = vsub.f32 %v383, %v415
        %v1304 = vsub.f32 %v384, %v416
        %v1305 = vsub.f32 %v385, %v417
        %v1306 = vsub.f32 %v386, %v418
        %v1307 = vsub.f32 %v387, %v419
        %v1308 = vsub.f32 %v388, %v420
        %v1309 = vsub.f32 %v389, %v421
        %v1310 = vsub.f32 %v390, %v422
        %v1311 = vsub.f32 %v391, %v423
        %v1312 = vsub.f32 %v392, %v424
        %v1313 = vsub.f32 %v393, %v425
        %v1314 = vsub.f32 %v394, %v426
        %v1315 = vsub.f32 %v395, %v427
        %v1316 = vsub.f32 %v396, %v428
        %v1317 = vsub.f32 %v397, %v429
        %v1318 = vsub.f32 %v398, %v430
        %v1319 = vsub.f32 %v399, %v431
        %v1320 = vsub.f32 %v400, %v432
        %v1321 = vsub.f32 %v401, %v433
        %v1322 = vsub.f32 %v402, %v434
        %v1323 = vsub.f32 %v403, %v435
        %v1324 = vsub.f32 %v404, %v436
        %v1325 = vsub.f32 %v405, %v437
        %v1326 = vsub.f32 %v406, %v438
        %v1327 = vsub.f32 %v407, %v439
        %v1328 = vsub.f32 %v408, %v440
        %v1329 = vmul.f32 %v1265, %v1297
        %v1330 = vmul.f32 %v1266, %v1298
        %v1331 = vmul.f32 %v1267, %v1299
        %v1332 = vmul.f32 %v1268, %v1300
        %v1333 = vmul.f32 %v1269, %v1301
        %v1334 = vmul.f32 %v1270, %v1302
        %v1335 = vmul.f32 %v1271, %v1303
        %v1336 = vmul.f32 %v1272, %v1304
        %v1337 = vmul.f32 %v1273, %v1305
        %v1338 = vmul.f32 %v1274, %v1306
        %v1339 = vmul.f32 %v1275, %v1307
        %v1340 = vmul.f32 %v1276, %v1308
        %v1341 = vmul.f32 %v1277, %v1309
        %v1342 = vmul.f32 %v1278, %v1310
        %v1343 = vmul.f32 %v1279, %v1311
        %v1344 = vmul.f32 %v1280, %v1312
        %v1345 = vmul.f32 %v1281, %v1313
        %v1346 = vmul.f32 %v1282, %v1314
        %v1347 = vmul.f32 %v1283, %v1315
        %v1348 = vmul.f32 %v1284, %v1316
        %v1349 = vmul.f32 %v1285, %v1317
        %v1350 = vmul.f32 %v1286, %v1318
        %v1351 = vmul.f32 %v1287, %v1319
        %v1352 = vmul.f32 %v1288, %v1320
        %v1353 = vmul.f32 %v1289, %v1321
        %v1354 = vmul.f32 %v1290, %v1322
        %v1355 = vmul.f32 %v1291, %v1323
        %v1356 = vmul.f32 %v1292, %v1324
        %v1357 = vmul.f32 %v1293, %v1325
        %v1358 = vmul.f32 %v1294, %v1326
        %v1359 = vmul.f32 %v1295, %v1327
        %v1360 = vmul.f32 %v1296, %v1328
        %v1361 = vadd.f32 %v1233, %v1329
        %v1362 = vadd.f32 %v1234, %v1330
        %v1363 = vadd.f32 %v1235, %v1331
        %v1364 = vadd.f32 %v1236, %v1332
        %v1365 = vadd.f32 %v1237, %v1333
        %v1366 = vadd.f32 %v1238, %v1334
        %v1367 = vadd.f32 %v1239, %v1335
        %v1368 = vadd.f32 %v1240, %v1336
        %v1369 = vadd.f32 %v1241, %v1337
        %v1370 = vadd.f32 %v1242, %v1338
        %v1371 = vadd.f32 %v1243, %v1339
        %v1372 = vadd.f32 %v1244, %v1340
        %v1373 = vadd.f32 %v1245, %v1341
        %v1374 = vadd.f32 %v1246, %v1342
        %v1375 = vadd.f32 %v1247, %v1343
        %v1376 = vadd.f32 %v1248, %v1344
        %v1377 = vadd.f32 %v1249, %v1345
        %v1378 = vadd.f32 %v1250, %v1346
        %v1379 = vadd.f32 %v1251, %v1347
        %v1380 = vadd.f32 %v1252, %v1348
        %v1381 = vadd.f32 %v1253, %v1349
        %v1382 = vadd.f32 %v1254, %v1350
        %v1383 = vadd.f32 %v1255, %v1351
        %v1384 = vadd.f32 %v1256, %v1352
        %v1385 = vadd.f32 %v1257, %v1353
        %v1386 = vadd.f32 %v1258, %v1354
        %v1387 = vadd.f32 %v1259, %v1355
        %v1388 = vadd.f32 %v1260, %v1356
        %v1389 = vadd.f32 %v1261, %v1357
        %v1390 = vadd.f32 %v1262, %v1358
        %v1391 = vadd.f32 %v1263, %v1359
        %v1392 = vadd.f32 %v1264, %v1360
        %1393 = vst [vmem:[%s369] sm:$0xff] %v1361
        %1394 = vst [vmem:[%s369 + $0x8] sm:$0xff] %v1362
        %1395 = vst [vmem:[%s369 + $0x10] sm:$0xff] %v1363
        %1396 = vst [vmem:[%s369 + $0x18] sm:$0xff] %v1364
        %1397 = vst [vmem:[%s369 + $0x20] sm:$0xff] %v1365
        %1398 = vst [vmem:[%s369 + $0x28] sm:$0xff] %v1366
        %1399 = vst [vmem:[%s369 + $0x30] sm:$0xff] %v1367
        %1400 = vst [vmem:[%s369 + $0x38] sm:$0xff] %v1368
        %1401 = vst [vmem:[%s369 + $0x40] sm:$0xff] %v1369
        %1402 = vst [vmem:[%s369 + $0x48] sm:$0xff] %v1370
        %1403 = vst [vmem:[%s369 + $0x50] sm:$0xff] %v1371
        %1404 = vst [vmem:[%s369 + $0x58] sm:$0xff] %v1372
        %1405 = vst [vmem:[%s369 + $0x60] sm:$0xff] %v1373
        %1406 = vst [vmem:[%s369 + $0x68] sm:$0xff] %v1374
        %1407 = vst [vmem:[%s369 + $0x70] sm:$0xff] %v1375
        %1408 = vst [vmem:[%s369 + $0x78] sm:$0xff] %v1376
        %1409 = vst [vmem:[%s369 + $0x80] sm:$0xff] %v1377
        %1410 = vst [vmem:[%s369 + $0x88] sm:$0xff] %v1378
        %1411 = vst [vmem:[%s369 + $0x90] sm:$0xff] %v1379
        %1412 = vst [vmem:[%s369 + $0x98] sm:$0xff] %v1380
        %1413 = vst [vmem:[%s369 + $0xa0] sm:$0xff] %v1381
        %1414 = vst [vmem:[%s369 + $0xa8] sm:$0xff] %v1382
        %1415 = vst [vmem:[%s369 + $0xb0] sm:$0xff] %v1383
        %1416 = vst [vmem:[%s369 + $0xb8] sm:$0xff] %v1384
        %1417 = vst [vmem:[%s369 + $0xc0] sm:$0xff] %v1385
        %1418 = vst [vmem:[%s369 + $0xc8] sm:$0xff] %v1386
        %1419 = vst [vmem:[%s369 + $0xd0] sm:$0xff] %v1387
        %1420 = vst [vmem:[%s369 + $0xd8] sm:$0xff] %v1388
        %1421 = vst [vmem:[%s369 + $0xe0] sm:$0xff] %v1389
        %1422 = vst [vmem:[%s369 + $0xe8] sm:$0xff] %v1390
        %1423 = vst [vmem:[%s369 + $0xf0] sm:$0xff] %v1391
        %1424 = vst [vmem:[%s369 + $0xf8] sm:$0xff] %v1392
        %s1425 = sand.u32 %s215, 1
        %s1426 = scalar_lea.sflag [#allocation4], %s1425
        %s1427 = sand.u32 %s215, 1
        %s1428 = smul.addr %s1427, 256
        %s1429 = scalar_lea.vmem [#allocation7], %s1428
        // Predicated region
        $region57: #{tpu_custom_call.1} parent=47 // pred_check
          %p1430 = pneg %p225
        $region58: #{tpu_custom_call.1} parent=47 // pred_check_branch
          %1432 = sbr.rel (%p1430) target = $region60
        $region59: #{tpu_custom_call.1} parent=47 // pred_region
          %s1433 = smul.u32 32, %s32
          %s1435 = ssub.s32 4096, 4096
          %1436 = vsyncadd %s1426, %s1435
          %s1437 = smul.addr %s31, 32
          %s1438 = sadd.s32 %s1433, %s1437
          %s1439 = smul.addr %s1438, 128
          %s1440 = scalar_lea.hbm %s7, %s1439
          %s1441 = sshll.u32 %s1429, 4
          %s1442 = int_to_ptr.vmem [resolvable:$true] %s1441
          %1447 = dma.vmem_to_hbm [thread:$0]  %s1442, 4096, %s1440, %s1426, 128, 128, 8
        $region60: #{tpu_custom_call.1} parent=47 // pred_fallthru
          _
      $region48: #{tpu_custom_call.1} parent=5 // pred_fallthru
        _
      %p1448 = scmp.le.s32.totalorder 2, %s22
      // Predicated region
      $region61: #{tpu_custom_call.1} parent=5 // pred_check
        %p1449 = pneg %p1448
      $region62: #{tpu_custom_call.1} parent=5 // pred_check_branch
        %1451 = sbr.rel (%p1449) target = $region64
      $region63: #{tpu_custom_call.1} parent=5 // pred_region
        %s1452 = ssub.s32 %s22, 2
        // Predicated region
        $region65: #{tpu_custom_call.1} parent=63 // pred_check
          %p1453 = pneg %p231
        $region66: #{tpu_custom_call.1} parent=63 // pred_check_branch
          %1455 = sbr.rel (%p1453) target = $region68
        $region67: #{tpu_custom_call.1} parent=63 // pred_region
          %s1456 = sand.u32 %s216, 1
          %s1457 = scalar_lea.sflag [#allocation4], %s1456
          %s1458 = sand.u32 %s216, 1
          %s1459 = smul.addr %s1458, 256
          %s1460 = scalar_lea.vmem [#allocation7], %s1459
          %1461 = dma.done %s1457, 4096
        $region68: #{tpu_custom_call.1} parent=63 // pred_fallthru
          _
      $region64: #{tpu_custom_call.1} parent=5 // pred_fallthru
        _
    $region6: #{tpu_custom_call.1} parent=1 // loop_footer
      %s26 = sadd.s32 1, %s22
    $region7: #{tpu_custom_call.1} parent=1 // loop_footer_branch
      %21 = sbr.rel target = $region3
    $region8: #{tpu_custom_call.1} parent=1 // loop_exit
      _
    %1462 = vsyncpa [#allocation3], 1
    %s1463 = scalar_lea.sflag [#allocation3], 1
    %1464 = vsyncpa %s1463, 1
    %1465 = vsyncpa [#allocation6], 1
    %s1466 = scalar_lea.sflag [#allocation6], 1
    %1467 = vsyncpa %s1466, 1
    %1468 = vsyncpa [#allocation4], 1
    %s1469 = scalar_lea.sflag [#allocation4], 1
    %1470 = vsyncpa %s1469, 1

</llo_original>
